<compile_context>
chip_gen: v5e
topology: v5e:2x2
jax: 0.10.0
libtpu: 0.0.40
codegen_flags: <defaults>
</compile_context>

<pallas_src>
import jax
import jax.numpy as jnp
from jax.experimental import pallas as pl
from jax.experimental.pallas import tpu as pltpu  # noqa: F401  (TPU backend)

NET_COMPLEX = 32
L1 = NET_COMPLEX        # 32
L2 = L1 * 2             # 64
L3 = L2 * 2             # 128
L4 = L3 * 2             # 256
BN_EPS = 1e-5
LEAKY_SLOPE = 0.2

# Packed parameter slab: one 128-lane-aligned slot per vector so every
# in-kernel slice starts at a lane-tile boundary and stays inside one tile.
SLOT = 128
OFF_W11, OFF_B11, OFF_B12 = 0 * SLOT, 1 * SLOT, 2 * SLOT
OFF_G2, OFF_BE2 = 3 * SLOT, 4 * SLOT
OFF_G3, OFF_BE3 = 5 * SLOT, 6 * SLOT
OFF_W4T, OFF_B4 = 7 * SLOT, 8 * SLOT
VEC_LEN = 9 * SLOT      # 1152 f32 = 4.5 KB, one tiny DMA


def _leaky_relu(x):
    return jnp.where(x >= 0.0, x, LEAKY_SLOPE * x)


def _batchnorm_train(x, gamma, beta):
    # Training-mode BatchNorm1d with batch stats (biased variance), single
    # pass: sum(x) and sum(x*x) reduce concurrently (shorter XLU dep chain).
    mean = jnp.mean(x, axis=0, keepdims=True)
    mean_sq = jnp.mean(x * x, axis=0, keepdims=True)
    var = jnp.maximum(mean_sq - mean * mean, 0.0)   # guard cancellation
    return (x - mean) * jax.lax.rsqrt(var + BN_EPS) * gamma + beta


def discriminator_kernel(x_ref, lab_ref, vec_ref, w12_ref, w2_ref, w3_ref,
                         out_ref):
    x = x_ref[...]                                   # (B, 1)   f32
    lab = lab_ref[...]                               # (B, C)   f32

    # Static, lane-tile-aligned slices out of the packed parameter slab.
    w11 = vec_ref[:, OFF_W11:OFF_W11 + L3]           # (1, 128)
    b11 = vec_ref[:, OFF_B11:OFF_B11 + L3]
    b12 = vec_ref[:, OFF_B12:OFF_B12 + L3]
    g2 = vec_ref[:, OFF_G2:OFF_G2 + L2]              # (1, 64)
    be2 = vec_ref[:, OFF_BE2:OFF_BE2 + L2]
    g3 = vec_ref[:, OFF_G3:OFF_G3 + L1]              # (1, 32)
    be3 = vec_ref[:, OFF_BE3:OFF_BE3 + L1]
    w4t = vec_ref[:, OFF_W4T:OFF_W4T + L1]           # (1, 32)
    b4 = vec_ref[:, OFF_B4:OFF_B4 + 1]               # (1, 1)

    # fc1_1 : K=1 "matmul" is an outer product -> VPU broadcast multiply,
    # keeping this stage off the MXU.
    h_x = _leaky_relu(x * w11 + b11)                                 # (B, L3)

    # fc1_2 : small MXU matmul (K = condition_dim).
    h_y = _leaky_relu(
        jnp.dot(lab, w12_ref[...], preferred_element_type=jnp.float32) + b12)

    # fc2 over concat([h_x, h_y], 1) WITHOUT materializing the concat: the two
    # 128-row halves of w2 are sliced statically (aligned), partial matmuls
    # (bf16 operands, f32 accumulation) sum into one value.  fc2 bias omitted:
    # exactly cancelled by the training-mode BN mean subtraction below.
    z2 = (jnp.dot(h_x.astype(jnp.bfloat16), w2_ref[:L3, :],
                  preferred_element_type=jnp.float32)
          + jnp.dot(h_y.astype(jnp.bfloat16), w2_ref[L3:, :],
                    preferred_element_type=jnp.float32))
    z2 = _leaky_relu(_batchnorm_train(z2, g2, be2))                  # (B, L2)

    # fc3 -> BN -> leaky_relu (fc3 bias likewise cancelled by BN).
    z3 = jnp.dot(z2.astype(jnp.bfloat16), w3_ref[...],
                 preferred_element_type=jnp.float32)
    z3 = _leaky_relu(_batchnorm_train(z3, g3, be3))                  # (B, L1)

    # fc4 : N=1 -> lane reduce (VPU/XLU) instead of the MXU (w4 pre-transposed).
    z4 = jnp.sum(z3 * w4t, axis=-1, keepdims=True) + b4              # (B, 1)

    # Numerically stable sigmoid; exact reciprocal keeps the output in [0, 1]
    # (approx reciprocal can overshoot and NaN a downstream log(1-p) loss).
    e = jnp.exp(-jnp.abs(z4))
    num = jnp.where(z4 >= 0.0, 1.0, e)
    out_ref[...] = num / (1.0 + e)


def _slot(v):
    v = jnp.asarray(v, jnp.float32).reshape(1, -1)
    return jnp.pad(v, ((0, 0), (0, SLOT - v.shape[1])))


def prepare_params(params):
    """One-time packing of parameters into kernel-ready form.

    Call once per parameter creation/update, NOT per forward call: the bf16
    casts, the w4 transpose and the vector packing are hoisted here so the
    per-call path emits no extra XLA ops."""
    assert params["w11"].shape[0] == 1, "kernel specialized for input_dim == 1"
    assert params["w4"].shape[1] == 1, "kernel specialized for output_dim == 1"
    vecs = jnp.concatenate(
        [_slot(params[k]) for k in
         ("w11", "b11", "b12", "g2", "be2", "g3", "be3")]
        + [_slot(params["w4"].T), _slot(params["b4"])], axis=1)
    # b2 / b3 intentionally omitted: cancelled by training-mode BatchNorm.
    return {
        "vecs": vecs,                                     # (1, VEC_LEN) f32
        "w12": jnp.asarray(params["w12"], jnp.float32),   # (C, L3)
        "w2": jnp.asarray(params["w2"], jnp.bfloat16),    # (L4, L2)
        "w3": jnp.asarray(params["w3"], jnp.bfloat16),    # (L2, L1)
    }


def _full_spec(shape):
    nd = len(shape)
    return pl.BlockSpec(shape, lambda *_, _nd=nd: (0,) * _nd)


def discriminator_forward(x, label, prep):
    """Single-block forward pass: the whole batch is one block so BatchNorm
    batch statistics cover the full batch.  Batch as many rows as possible
    per call (real+fake passes, micro-batches) to amortize launch overhead;
    per-row VMEM footprint is ~2.5 KB, so keep B below ~8k on v7x (64 MiB
    VMEM) / roughly 2x that on v5e/v6e, or set vmem_limit_bytes explicitly.

    TODO(synk): for larger B, tile the batch across a grid with
    dimension_semantics=("parallel",) and a two-pass BN (sum/sumsq scratch
    accumulated over an "arbitrary" axis) so both v7x TensorCores are used,
    and switch to a lane-dense (1, B) output layout."""
    assert x.shape[1] == 1, "kernel specialized for input_dim == 1"
    B = x.shape[0]
    args = (x, label, prep["vecs"], prep["w12"], prep["w2"], prep["w3"])
    return pl.pallas_call(
        discriminator_kernel,
        out_shape=jax.ShapeDtypeStruct((B, 1), jnp.float32),
        in_specs=[_full_spec(a.shape) for a in args],
        out_specs=pl.BlockSpec((B, 1), lambda: (0, 0)),
    )(*args)


def init_params(key, input_dim=1, condition_dim=10, output_dim=1):
    """Raw parameters (feature-last layout), normal(0, 0.02) init like
    weight_init(mean=0, std=0.02).  Biases are randomized here on purpose so
    the b2/b3-cancellation in the kernel is exercised by the reference check."""
    ks = jax.random.split(key, 10)
    std = 0.02
    n = lambda k, s: jax.random.normal(k, s, jnp.float32) * std
    return {
        "w11": n(ks[0], (input_dim, L3)), "b11": n(ks[1], (1, L3)),
        "w12": n(ks[2], (condition_dim, L3)), "b12": n(ks[3], (1, L3)),
        "w2": n(ks[4], (L4, L2)), "b2": n(ks[5], (1, L2)),
        "g2": jnp.ones((1, L2), jnp.float32),
        "be2": jnp.zeros((1, L2), jnp.float32),
        "w3": n(ks[6], (L2, L1)), "b3": n(ks[7], (1, L1)),
        "g3": jnp.ones((1, L1), jnp.float32),
        "be3": jnp.zeros((1, L1), jnp.float32),
        "w4": n(ks[8], (L1, output_dim)), "b4": n(ks[9], (1, output_dim)),
    }


def reference_forward(x, label, params):
    """Pure-JAX f32 reference matching the PyTorch forward (training mode)."""
    lk = lambda v: jnp.where(v >= 0.0, v, LEAKY_SLOPE * v)

    def bn(v, g, b):
        m = jnp.mean(v, axis=0, keepdims=True)
        var = jnp.mean((v - m) ** 2, axis=0, keepdims=True)
        return (v - m) / jnp.sqrt(var + BN_EPS) * g + b

    hx = lk(x @ params["w11"] + params["b11"])
    hy = lk(label @ params["w12"] + params["b12"])
    h = jnp.concatenate([hx, hy], axis=1)
    z2 = lk(bn(h @ params["w2"] + params["b2"], params["g2"], params["be2"]))
    z3 = lk(bn(z2 @ params["w3"] + params["b3"], params["g3"], params["be3"]))
    return jax.nn.sigmoid(z3 @ params["w4"] + params["b4"])


if __name__ == "__main__":
    key = jax.random.PRNGKey(0)
    k_in, k_lab, k_par = jax.random.split(key, 3)

    # B multiple of 256 fills a full MXU pass M-dim on v6e/v7x while keeping
    # the total footprint tiny; real training loops should batch real+fake
    # passes / micro-batches together into one call (see docstring).
    B = 256
    input_dim, condition_dim = 1, 10

    x = jax.random.normal(k_in, (B, input_dim), jnp.float32)
    lab_idx = jax.random.randint(k_lab, (B,), 0, condition_dim)
    label = jax.nn.one_hot(lab_idx, condition_dim, dtype=jnp.float32)

    params = init_params(k_par, input_dim, condition_dim, 1)
    prep = prepare_params(params)   # once per parameter update, not per call

    out = jax.block_until_ready(discriminator_forward(x, label, prep))

    assert out.shape == (B, 1)
    assert bool(jnp.all(jnp.isfinite(out)))
    assert bool(jnp.all((out >= 0.0) & (out <= 1.0)))

    # Validate against the f32 reference (kernel uses bf16 MXU operands, so a
    # loose absolute tolerance on the sigmoid output).
    ref = reference_forward(x, label, params)
    assert float(jnp.max(jnp.abs(out - ref))) < 5e-2

    print("KERNEL_OK")
</pallas_src>

<mosaic_0001>
module attributes {stable_mosaic.version = 11 : i64} {
  func.func @discriminator_kernel(%arg0: memref<256x1xf32, #tpu.memory_space<vmem>>, %arg1: memref<256x10xf32, #tpu.memory_space<vmem>>, %arg2: memref<1x1152xf32, #tpu.memory_space<vmem>>, %arg3: memref<10x128xf32, #tpu.memory_space<vmem>>, %arg4: memref<256x64xbf16, #tpu.memory_space<vmem>>, %arg5: memref<64x32xbf16, #tpu.memory_space<vmem>>, %arg6: memref<256x1xf32, #tpu.memory_space<vmem>>) attributes {dimension_semantics = [], scalar_prefetch = 0 : i64, scratch_operands = 0 : i64, tpu.core_type = #tpu.core_type<tc>} {
    %c0 = arith.constant 0 : index
    %c0_0 = arith.constant 0 : index
    %0 = vector.load %arg0[%c0, %c0_0] : memref<256x1xf32, #tpu.memory_space<vmem>>, vector<256x1xf32>
    %c0_1 = arith.constant 0 : index
    %c0_2 = arith.constant 0 : index
    %1 = vector.load %arg1[%c0_1, %c0_2] : memref<256x10xf32, #tpu.memory_space<vmem>>, vector<256x10xf32>
    %c0_3 = arith.constant 0 : index
    %c0_4 = arith.constant 0 : index
    %2 = vector.load %arg2[%c0_3, %c0_4] : memref<1x1152xf32, #tpu.memory_space<vmem>>, vector<1x128xf32>
    %c0_5 = arith.constant 0 : index
    %c128 = arith.constant 128 : index
    %3 = vector.load %arg2[%c0_5, %c128] : memref<1x1152xf32, #tpu.memory_space<vmem>>, vector<1x128xf32>
    %c0_6 = arith.constant 0 : index
    %c256 = arith.constant 256 : index
    %4 = vector.load %arg2[%c0_6, %c256] : memref<1x1152xf32, #tpu.memory_space<vmem>>, vector<1x128xf32>
    %c0_7 = arith.constant 0 : index
    %c384 = arith.constant 384 : index
    %5 = vector.load %arg2[%c0_7, %c384] : memref<1x1152xf32, #tpu.memory_space<vmem>>, vector<1x64xf32>
    %c0_8 = arith.constant 0 : index
    %c512 = arith.constant 512 : index
    %6 = vector.load %arg2[%c0_8, %c512] : memref<1x1152xf32, #tpu.memory_space<vmem>>, vector<1x64xf32>
    %c0_9 = arith.constant 0 : index
    %c640 = arith.constant 640 : index
    %7 = vector.load %arg2[%c0_9, %c640] : memref<1x1152xf32, #tpu.memory_space<vmem>>, vector<1x32xf32>
    %c0_10 = arith.constant 0 : index
    %c768 = arith.constant 768 : index
    %8 = vector.load %arg2[%c0_10, %c768] : memref<1x1152xf32, #tpu.memory_space<vmem>>, vector<1x32xf32>
    %c0_11 = arith.constant 0 : index
    %c896 = arith.constant 896 : index
    %9 = vector.load %arg2[%c0_11, %c896] : memref<1x1152xf32, #tpu.memory_space<vmem>>, vector<1x32xf32>
    %c0_12 = arith.constant 0 : index
    %c1024 = arith.constant 1024 : index
    %10 = vector.load %arg2[%c0_12, %c1024] : memref<1x1152xf32, #tpu.memory_space<vmem>>, vector<1x1xf32>
    %11 = vector.broadcast %0 : vector<256x1xf32> to vector<256x128xf32>
    %12 = vector.broadcast %2 : vector<1x128xf32> to vector<256x128xf32>
    %13 = arith.mulf %11, %12 : vector<256x128xf32>
    %14 = vector.broadcast %3 : vector<1x128xf32> to vector<256x128xf32>
    %15 = arith.addf %13, %14 : vector<256x128xf32>
    %cst = arith.constant 0.000000e+00 : f32
    %16 = vector.broadcast %cst : f32 to vector<256x128xf32>
    %17 = arith.cmpf oge, %15, %16 : vector<256x128xf32>
    %cst_13 = arith.constant 2.000000e-01 : f32
    %18 = vector.broadcast %cst_13 : f32 to vector<256x128xf32>
    %19 = arith.mulf %18, %15 : vector<256x128xf32>
    %20 = arith.select %17, %15, %19 : vector<256x128xi1>, vector<256x128xf32>
    %c0_14 = arith.constant 0 : index
    %c0_15 = arith.constant 0 : index
    %21 = vector.load %arg3[%c0_14, %c0_15] : memref<10x128xf32, #tpu.memory_space<vmem>>, vector<10x128xf32>
    %cst_16 = arith.constant dense<0.000000e+00> : vector<256x128xf32>
    %22 = tpu.matmul %1, %21, %cst_16 {dimension_numbers = #tpu.dot_dimension_numbers<[1], [0], [0], [1], [0, 0, 1, 1], [], []>} : vector<256x10xf32>, vector<10x128xf32>, vector<256x128xf32> -> vector<256x128xf32>
    %23 = vector.broadcast %4 : vector<1x128xf32> to vector<256x128xf32>
    %24 = arith.addf %22, %23 : vector<256x128xf32>
    %cst_17 = arith.constant 0.000000e+00 : f32
    %25 = vector.broadcast %cst_17 : f32 to vector<256x128xf32>
    %26 = arith.cmpf oge, %24, %25 : vector<256x128xf32>
    %cst_18 = arith.constant 2.000000e-01 : f32
    %27 = vector.broadcast %cst_18 : f32 to vector<256x128xf32>
    %28 = arith.mulf %27, %24 : vector<256x128xf32>
    %29 = arith.select %26, %24, %28 : vector<256x128xi1>, vector<256x128xf32>
    %30 = arith.truncf %20 : vector<256x128xf32> to vector<256x128xbf16>
    %c0_19 = arith.constant 0 : index
    %c0_20 = arith.constant 0 : index
    %31 = vector.load %arg4[%c0_19, %c0_20] : memref<256x64xbf16, #tpu.memory_space<vmem>>, vector<128x64xbf16>
    %cst_21 = arith.constant dense<0.000000e+00> : vector<256x64xf32>
    %32 = tpu.matmul %30, %31, %cst_21 {dimension_numbers = #tpu.dot_dimension_numbers<[1], [0], [0], [1], [0, 0, 1, 1], [], []>} : vector<256x128xbf16>, vector<128x64xbf16>, vector<256x64xf32> -> vector<256x64xf32>
    %33 = arith.truncf %29 : vector<256x128xf32> to vector<256x128xbf16>
    %c128_22 = arith.constant 128 : index
    %c0_23 = arith.constant 0 : index
    %34 = vector.load %arg4[%c128_22, %c0_23] : memref<256x64xbf16, #tpu.memory_space<vmem>>, vector<128x64xbf16>
    %cst_24 = arith.constant dense<0.000000e+00> : vector<256x64xf32>
    %35 = tpu.matmul %33, %34, %cst_24 {dimension_numbers = #tpu.dot_dimension_numbers<[1], [0], [0], [1], [0, 0, 1, 1], [], []>} : vector<256x128xbf16>, vector<128x64xbf16>, vector<256x64xf32> -> vector<256x64xf32>
    %36 = arith.addf %32, %35 : vector<256x64xf32>
    %cst_25 = arith.constant dense<0.000000e+00> : vector<64xf32>
    %37 = vector.multi_reduction <add>, %36, %cst_25 [0] : vector<256x64xf32> to vector<64xf32>
    %38 = vector.shape_cast %37 : vector<64xf32> to vector<1x64xf32>
    %cst_26 = arith.constant 2.560000e+02 : f32
    %39 = vector.broadcast %cst_26 : f32 to vector<1x64xf32>
    %40 = arith.divf %38, %39 : vector<1x64xf32>
    %41 = arith.mulf %36, %36 : vector<256x64xf32>
    %cst_27 = arith.constant dense<0.000000e+00> : vector<64xf32>
    %42 = vector.multi_reduction <add>, %41, %cst_27 [0] : vector<256x64xf32> to vector<64xf32>
    %43 = vector.shape_cast %42 : vector<64xf32> to vector<1x64xf32>
    %cst_28 = arith.constant 2.560000e+02 : f32
    %44 = vector.broadcast %cst_28 : f32 to vector<1x64xf32>
    %45 = arith.divf %43, %44 : vector<1x64xf32>
    %46 = arith.mulf %40, %40 : vector<1x64xf32>
    %47 = arith.subf %45, %46 : vector<1x64xf32>
    %cst_29 = arith.constant 0.000000e+00 : f32
    %48 = vector.broadcast %cst_29 : f32 to vector<1x64xf32>
    %49 = arith.maximumf %47, %48 : vector<1x64xf32>
    %50 = vector.broadcast %40 : vector<1x64xf32> to vector<256x64xf32>
    %51 = arith.subf %36, %50 : vector<256x64xf32>
    %cst_30 = arith.constant 9.99999974E-6 : f32
    %52 = vector.broadcast %cst_30 : f32 to vector<1x64xf32>
    %53 = arith.addf %49, %52 : vector<1x64xf32>
    %54 = math.rsqrt %53 : vector<1x64xf32>
    %55 = vector.broadcast %54 : vector<1x64xf32> to vector<256x64xf32>
    %56 = arith.mulf %51, %55 : vector<256x64xf32>
    %57 = vector.broadcast %5 : vector<1x64xf32> to vector<256x64xf32>
    %58 = arith.mulf %56, %57 : vector<256x64xf32>
    %59 = vector.broadcast %6 : vector<1x64xf32> to vector<256x64xf32>
    %60 = arith.addf %58, %59 : vector<256x64xf32>
    %cst_31 = arith.constant 0.000000e+00 : f32
    %61 = vector.broadcast %cst_31 : f32 to vector<256x64xf32>
    %62 = arith.cmpf oge, %60, %61 : vector<256x64xf32>
    %cst_32 = arith.constant 2.000000e-01 : f32
    %63 = vector.broadcast %cst_32 : f32 to vector<256x64xf32>
    %64 = arith.mulf %63, %60 : vector<256x64xf32>
    %65 = arith.select %62, %60, %64 : vector<256x64xi1>, vector<256x64xf32>
    %66 = arith.truncf %65 : vector<256x64xf32> to vector<256x64xbf16>
    %c0_33 = arith.constant 0 : index
    %c0_34 = arith.constant 0 : index
    %67 = vector.load %arg5[%c0_33, %c0_34] : memref<64x32xbf16, #tpu.memory_space<vmem>>, vector<64x32xbf16>
    %cst_35 = arith.constant dense<0.000000e+00> : vector<256x32xf32>
    %68 = tpu.matmul %66, %67, %cst_35 {dimension_numbers = #tpu.dot_dimension_numbers<[1], [0], [0], [1], [0, 0, 1, 1], [], []>} : vector<256x64xbf16>, vector<64x32xbf16>, vector<256x32xf32> -> vector<256x32xf32>
    %cst_36 = arith.constant dense<0.000000e+00> : vector<32xf32>
    %69 = vector.multi_reduction <add>, %68, %cst_36 [0] : vector<256x32xf32> to vector<32xf32>
    %70 = vector.shape_cast %69 : vector<32xf32> to vector<1x32xf32>
    %cst_37 = arith.constant 2.560000e+02 : f32
    %71 = vector.broadcast %cst_37 : f32 to vector<1x32xf32>
    %72 = arith.divf %70, %71 : vector<1x32xf32>
    %73 = arith.mulf %68, %68 : vector<256x32xf32>
    %cst_38 = arith.constant dense<0.000000e+00> : vector<32xf32>
    %74 = vector.multi_reduction <add>, %73, %cst_38 [0] : vector<256x32xf32> to vector<32xf32>
    %75 = vector.shape_cast %74 : vector<32xf32> to vector<1x32xf32>
    %cst_39 = arith.constant 2.560000e+02 : f32
    %76 = vector.broadcast %cst_39 : f32 to vector<1x32xf32>
    %77 = arith.divf %75, %76 : vector<1x32xf32>
    %78 = arith.mulf %72, %72 : vector<1x32xf32>
    %79 = arith.subf %77, %78 : vector<1x32xf32>
    %cst_40 = arith.constant 0.000000e+00 : f32
    %80 = vector.broadcast %cst_40 : f32 to vector<1x32xf32>
    %81 = arith.maximumf %79, %80 : vector<1x32xf32>
    %82 = vector.broadcast %72 : vector<1x32xf32> to vector<256x32xf32>
    %83 = arith.subf %68, %82 : vector<256x32xf32>
    %cst_41 = arith.constant 9.99999974E-6 : f32
    %84 = vector.broadcast %cst_41 : f32 to vector<1x32xf32>
    %85 = arith.addf %81, %84 : vector<1x32xf32>
    %86 = math.rsqrt %85 : vector<1x32xf32>
    %87 = vector.broadcast %86 : vector<1x32xf32> to vector<256x32xf32>
    %88 = arith.mulf %83, %87 : vector<256x32xf32>
    %89 = vector.broadcast %7 : vector<1x32xf32> to vector<256x32xf32>
    %90 = arith.mulf %88, %89 : vector<256x32xf32>
    %91 = vector.broadcast %8 : vector<1x32xf32> to vector<256x32xf32>
    %92 = arith.addf %90, %91 : vector<256x32xf32>
    %cst_42 = arith.constant 0.000000e+00 : f32
    %93 = vector.broadcast %cst_42 : f32 to vector<256x32xf32>
    %94 = arith.cmpf oge, %92, %93 : vector<256x32xf32>
    %cst_43 = arith.constant 2.000000e-01 : f32
    %95 = vector.broadcast %cst_43 : f32 to vector<256x32xf32>
    %96 = arith.mulf %95, %92 : vector<256x32xf32>
    %97 = arith.select %94, %92, %96 : vector<256x32xi1>, vector<256x32xf32>
    %98 = vector.broadcast %9 : vector<1x32xf32> to vector<256x32xf32>
    %99 = arith.mulf %97, %98 : vector<256x32xf32>
    %cst_44 = arith.constant dense<0.000000e+00> : vector<256xf32>
    %100 = vector.multi_reduction <add>, %99, %cst_44 [1] : vector<256x32xf32> to vector<256xf32>
    %101 = vector.shape_cast %100 : vector<256xf32> to vector<256x1xf32>
    %102 = vector.broadcast %10 : vector<1x1xf32> to vector<256x1xf32>
    %103 = arith.addf %101, %102 : vector<256x1xf32>
    %104 = math.absf %103 : vector<256x1xf32>
    %cst_45 = arith.constant 0.000000e+00 : f32
    %105 = vector.broadcast %cst_45 : f32 to vector<256x1xf32>
    %106 = arith.subf %105, %104 : vector<256x1xf32>
    %107 = math.exp %106 : vector<256x1xf32>
    %cst_46 = arith.constant 0.000000e+00 : f32
    %108 = vector.broadcast %cst_46 : f32 to vector<256x1xf32>
    %109 = arith.cmpf oge, %103, %108 : vector<256x1xf32>
    %cst_47 = arith.constant 1.000000e+00 : f32
    %110 = vector.broadcast %cst_47 : f32 to vector<256x1xf32>
    %111 = arith.select %109, %110, %107 : vector<256x1xi1>, vector<256x1xf32>
    %cst_48 = arith.constant 1.000000e+00 : f32
    %112 = vector.broadcast %cst_48 : f32 to vector<256x1xf32>
    %113 = arith.addf %112, %107 : vector<256x1xf32>
    %114 = arith.divf %111, %113 : vector<256x1xf32>
    %c0_49 = arith.constant 0 : index
    %c0_50 = arith.constant 0 : index
    %115 = vector.load %arg6[%c0_49, %c0_50] : memref<256x1xf32, #tpu.memory_space<vmem>>, vector<256x1xf32>
    tpu.vector_store %arg6[%c0_49, %c0_50], %114 {strides = array<i32>} : memref<256x1xf32, #tpu.memory_space<vmem>>, vector<256x1xf32>,
    return
  }
}

</mosaic_0001>

<llo_original>
// kernel: tpu_custom_call.1
$region0: #{tpu_custom_call.1}
  #allocation0 [shape = 'u32[]', space=smem, size = 0x4, offset = 0x4, fixed_abs, tag = 'smem constant byte address 0x4 - core index']
  #allocation1 [shape = 'u32[72,128]{1,0:T(1,128)}', space=vmem, size = 0x9000, scoped, tag = 'internal scratch']
  %s0 = inlined_call_operand.vmem [shape: f32[256,1], index: 0, kind: input, shape index: {}]
  %s1 = inlined_call_operand.vmem [shape: f32[256,10], index: 1, kind: input, shape index: {}]
  %s2 = inlined_call_operand.vmem [shape: f32[1,1152], index: 2, kind: input, shape index: {}]
  %s3 = inlined_call_operand.vmem [shape: f32[10,128], index: 3, kind: input, shape index: {}]
  %s4 = inlined_call_operand.vmem [shape: bf16[256,64], index: 4, kind: input, shape index: {}]
  %s5 = inlined_call_operand.vmem [shape: bf16[64,32], index: 5, kind: input, shape index: {}]
  %s6 = inlined_call_operand.vmem [shape: f32[256,1], index: 6, kind: output, shape index: {}]
  %s7 = sld [smem:[#allocation0]]
  $region34: #{tpu_custom_call.1} parent=0
    _
  %s9 = ssub.s32 1, %s7
  %s10 = scalar_select 0, %s9, %s7
  // Predicated region
  $region2: #{tpu_custom_call.1} parent=0 // pred_check
    _
  $region3: #{tpu_custom_call.1} parent=0 // pred_check_branch
    %12 = sbr.rel (0) target = $region5
  $region4: #{tpu_custom_call.1} parent=0 // pred_region
    _
  $region5: #{tpu_custom_call.1} parent=0 // pred_fallthru
    _
  // Predicated region
  $region6: #{tpu_custom_call.1} parent=0 // pred_check
    _
  $region7: #{tpu_custom_call.1} parent=0 // pred_check_branch
    %14 = sbr.rel (0) target = $region9
  $region8: #{tpu_custom_call.1} parent=0 // pred_region
    _
  $region9: #{tpu_custom_call.1} parent=0 // pred_fallthru
    _
  // Predicated region
  $region10: #{tpu_custom_call.1} parent=0 // pred_check
    _
  $region11: #{tpu_custom_call.1} parent=0 // pred_check_branch
    %16 = sbr.rel (0) target = $region13
  $region12: #{tpu_custom_call.1} parent=0 // pred_region
    _
  $region13: #{tpu_custom_call.1} parent=0 // pred_fallthru
    _
  // Predicated region
  $region14: #{tpu_custom_call.1} parent=0 // pred_check
    _
  $region15: #{tpu_custom_call.1} parent=0 // pred_check_branch
    %18 = sbr.rel (0) target = $region17
  $region16: #{tpu_custom_call.1} parent=0 // pred_region
    _
  $region17: #{tpu_custom_call.1} parent=0 // pred_fallthru
    _
  // Predicated region
  $region18: #{tpu_custom_call.1} parent=0 // pred_check
    _
  $region19: #{tpu_custom_call.1} parent=0 // pred_check_branch
    %20 = sbr.rel (0) target = $region21
  $region20: #{tpu_custom_call.1} parent=0 // pred_region
    _
  $region21: #{tpu_custom_call.1} parent=0 // pred_fallthru
    _
  // Predicated region
  $region22: #{tpu_custom_call.1} parent=0 // pred_check
    _
  $region23: #{tpu_custom_call.1} parent=0 // pred_check_branch
    %22 = sbr.rel (0) target = $region25
  $region24: #{tpu_custom_call.1} parent=0 // pred_region
    _
  $region25: #{tpu_custom_call.1} parent=0 // pred_fallthru
    _
  %v24 = vld [vmem:[%s0] sm:$0xff]
  %v25 = vld [vmem:[%s0 + $0x8] sm:$0xff]
  %v26 = vld [vmem:[%s0 + $0x10] sm:$0xff]
  %v27 = vld [vmem:[%s0 + $0x18] sm:$0xff]
  %v28 = vld [vmem:[%s0 + $0x20] sm:$0xff]
  %v29 = vld [vmem:[%s0 + $0x28] sm:$0xff]
  %v30 = vld [vmem:[%s0 + $0x30] sm:$0xff]
  %v31 = vld [vmem:[%s0 + $0x38] sm:$0xff]
  %v32 = vld [vmem:[%s0 + $0x40] sm:$0xff]
  %v33 = vld [vmem:[%s0 + $0x48] sm:$0xff]
  %v34 = vld [vmem:[%s0 + $0x50] sm:$0xff]
  %v35 = vld [vmem:[%s0 + $0x58] sm:$0xff]
  %v36 = vld [vmem:[%s0 + $0x60] sm:$0xff]
  %v37 = vld [vmem:[%s0 + $0x68] sm:$0xff]
  %v38 = vld [vmem:[%s0 + $0x70] sm:$0xff]
  %v39 = vld [vmem:[%s0 + $0x78] sm:$0xff]
  %v40 = vld [vmem:[%s0 + $0x80] sm:$0xff]
  %v41 = vld [vmem:[%s0 + $0x88] sm:$0xff]
  %v42 = vld [vmem:[%s0 + $0x90] sm:$0xff]
  %v43 = vld [vmem:[%s0 + $0x98] sm:$0xff]
  %v44 = vld [vmem:[%s0 + $0xa0] sm:$0xff]
  %v45 = vld [vmem:[%s0 + $0xa8] sm:$0xff]
  %v46 = vld [vmem:[%s0 + $0xb0] sm:$0xff]
  %v47 = vld [vmem:[%s0 + $0xb8] sm:$0xff]
  %v48 = vld [vmem:[%s0 + $0xc0] sm:$0xff]
  %v49 = vld [vmem:[%s0 + $0xc8] sm:$0xff]
  %v50 = vld [vmem:[%s0 + $0xd0] sm:$0xff]
  %v51 = vld [vmem:[%s0 + $0xd8] sm:$0xff]
  %v52 = vld [vmem:[%s0 + $0xe0] sm:$0xff]
  %v53 = vld [vmem:[%s0 + $0xe8] sm:$0xff]
  %v54 = vld [vmem:[%s0 + $0xf0] sm:$0xff]
  %v55 = vld [vmem:[%s0 + $0xf8] sm:$0xff]
  %v56 = vld [vmem:[%s1] sm:$0xff]
  %v57 = vld [vmem:[%s1 + $0x8] sm:$0xff]
  %v58 = vld [vmem:[%s1 + $0x10] sm:$0xff]
  %v59 = vld [vmem:[%s1 + $0x18] sm:$0xff]
  %v60 = vld [vmem:[%s1 + $0x20] sm:$0xff]
  %v61 = vld [vmem:[%s1 + $0x28] sm:$0xff]
  %v62 = vld [vmem:[%s1 + $0x30] sm:$0xff]
  %v63 = vld [vmem:[%s1 + $0x38] sm:$0xff]
  %v64 = vld [vmem:[%s1 + $0x40] sm:$0xff]
  %v65 = vld [vmem:[%s1 + $0x48] sm:$0xff]
  %v66 = vld [vmem:[%s1 + $0x50] sm:$0xff]
  %v67 = vld [vmem:[%s1 + $0x58] sm:$0xff]
  %v68 = vld [vmem:[%s1 + $0x60] sm:$0xff]
  %v69 = vld [vmem:[%s1 + $0x68] sm:$0xff]
  %v70 = vld [vmem:[%s1 + $0x70] sm:$0xff]
  %v71 = vld [vmem:[%s1 + $0x78] sm:$0xff]
  %v72 = vld [vmem:[%s1 + $0x80] sm:$0xff]
  %v73 = vld [vmem:[%s1 + $0x88] sm:$0xff]
  %v74 = vld [vmem:[%s1 + $0x90] sm:$0xff]
  %v75 = vld [vmem:[%s1 + $0x98] sm:$0xff]
  %v76 = vld [vmem:[%s1 + $0xa0] sm:$0xff]
  %v77 = vld [vmem:[%s1 + $0xa8] sm:$0xff]
  %v78 = vld [vmem:[%s1 + $0xb0] sm:$0xff]
  %v79 = vld [vmem:[%s1 + $0xb8] sm:$0xff]
  %v80 = vld [vmem:[%s1 + $0xc0] sm:$0xff]
  %v81 = vld [vmem:[%s1 + $0xc8] sm:$0xff]
  %v82 = vld [vmem:[%s1 + $0xd0] sm:$0xff]
  %v83 = vld [vmem:[%s1 + $0xd8] sm:$0xff]
  %v84 = vld [vmem:[%s1 + $0xe0] sm:$0xff]
  %v85 = vld [vmem:[%s1 + $0xe8] sm:$0xff]
  %v86 = vld [vmem:[%s1 + $0xf0] sm:$0xff]
  %v87 = vld [vmem:[%s1 + $0xf8] sm:$0xff]
  %v88 = vld [vmem:[%s2] sm:$0x1]
  %v89 = vld [vmem:[%s2 + $0x1] sm:$0x1]
  %v90 = vld [vmem:[%s2 + $0x2] sm:$0x1]
  %v91 = vld [vmem:[%s2 + $0x3] sm:$0x1]
  %v92 = vld [vmem:[%s2 + $0x4] sm:$0x1]
  %v93 = vld [vmem:[%s2 + $0x5] sm:$0x1]
  %v94 = vld [vmem:[%s2 + $0x6] sm:$0x1]
  %v95 = vld [vmem:[%s2 + $0x7] sm:$0x1]
  %v96 = vld [vmem:[%s2 + $0x8] sm:$0x1]
  %98 = vset.pattern.permute.xlu0 0
  %99 = vperm.xlu0 %98, %v24
  %v100 = vpop.permute.xlu0 %99
  %103 = vset.pattern.permute.xlu0 0
  %104 = vperm.xlu0 %103, %v25
  %v105 = vpop.permute.xlu0 %104
  %108 = vset.pattern.permute.xlu0 0
  %109 = vperm.xlu0 %108, %v26
  %v110 = vpop.permute.xlu0 %109
  %113 = vset.pattern.permute.xlu0 0
  %114 = vperm.xlu0 %113, %v27
  %v115 = vpop.permute.xlu0 %114
  %118 = vset.pattern.permute.xlu0 0
  %119 = vperm.xlu0 %118, %v28
  %v120 = vpop.permute.xlu0 %119
  %123 = vset.pattern.permute.xlu0 0
  %124 = vperm.xlu0 %123, %v29
  %v125 = vpop.permute.xlu0 %124
  %128 = vset.pattern.permute.xlu0 0
  %129 = vperm.xlu0 %128, %v30
  %v130 = vpop.permute.xlu0 %129
  %133 = vset.pattern.permute.xlu0 0
  %134 = vperm.xlu0 %133, %v31
  %v135 = vpop.permute.xlu0 %134
  %138 = vset.pattern.permute.xlu0 0
  %139 = vperm.xlu0 %138, %v32
  %v140 = vpop.permute.xlu0 %139
  %143 = vset.pattern.permute.xlu0 0
  %144 = vperm.xlu0 %143, %v33
  %v145 = vpop.permute.xlu0 %144
  %148 = vset.pattern.permute.xlu0 0
  %149 = vperm.xlu0 %148, %v34
  %v150 = vpop.permute.xlu0 %149
  %153 = vset.pattern.permute.xlu0 0
  %154 = vperm.xlu0 %153, %v35
  %v155 = vpop.permute.xlu0 %154
  %158 = vset.pattern.permute.xlu0 0
  %159 = vperm.xlu0 %158, %v36
  %v160 = vpop.permute.xlu0 %159
  %163 = vset.pattern.permute.xlu0 0
  %164 = vperm.xlu0 %163, %v37
  %v165 = vpop.permute.xlu0 %164
  %168 = vset.pattern.permute.xlu0 0
  %169 = vperm.xlu0 %168, %v38
  %v170 = vpop.permute.xlu0 %169
  %173 = vset.pattern.permute.xlu0 0
  %174 = vperm.xlu0 %173, %v39
  %v175 = vpop.permute.xlu0 %174
  %178 = vset.pattern.permute.xlu0 0
  %179 = vperm.xlu0 %178, %v40
  %v180 = vpop.permute.xlu0 %179
  %183 = vset.pattern.permute.xlu0 0
  %184 = vperm.xlu0 %183, %v41
  %v185 = vpop.permute.xlu0 %184
  %188 = vset.pattern.permute.xlu0 0
  %189 = vperm.xlu0 %188, %v42
  %v190 = vpop.permute.xlu0 %189
  %193 = vset.pattern.permute.xlu0 0
  %194 = vperm.xlu0 %193, %v43
  %v195 = vpop.permute.xlu0 %194
  %198 = vset.pattern.permute.xlu0 0
  %199 = vperm.xlu0 %198, %v44
  %v200 = vpop.permute.xlu0 %199
  %203 = vset.pattern.permute.xlu0 0
  %204 = vperm.xlu0 %203, %v45
  %v205 = vpop.permute.xlu0 %204
  %208 = vset.pattern.permute.xlu0 0
  %209 = vperm.xlu0 %208, %v46
  %v210 = vpop.permute.xlu0 %209
  %213 = vset.pattern.permute.xlu0 0
  %214 = vperm.xlu0 %213, %v47
  %v215 = vpop.permute.xlu0 %214
  %218 = vset.pattern.permute.xlu0 0
  %219 = vperm.xlu0 %218, %v48
  %v220 = vpop.permute.xlu0 %219
  %223 = vset.pattern.permute.xlu0 0
  %224 = vperm.xlu0 %223, %v49
  %v225 = vpop.permute.xlu0 %224
  %228 = vset.pattern.permute.xlu0 0
  %229 = vperm.xlu0 %228, %v50
  %v230 = vpop.permute.xlu0 %229
  %233 = vset.pattern.permute.xlu0 0
  %234 = vperm.xlu0 %233, %v51
  %v235 = vpop.permute.xlu0 %234
  %238 = vset.pattern.permute.xlu0 0
  %239 = vperm.xlu0 %238, %v52
  %v240 = vpop.permute.xlu0 %239
  %243 = vset.pattern.permute.xlu0 0
  %244 = vperm.xlu0 %243, %v53
  %v245 = vpop.permute.xlu0 %244
  %248 = vset.pattern.permute.xlu0 0
  %249 = vperm.xlu0 %248, %v54
  %v250 = vpop.permute.xlu0 %249
  %253 = vset.pattern.permute.xlu0 0
  %254 = vperm.xlu0 %253, %v55
  %v255 = vpop.permute.xlu0 %254
  %v258 = vperm.slane %v88, 0
  %v260 = vmul.f32 %v100, %v258
  %v261 = vmul.f32 %v105, %v258
  %v262 = vmul.f32 %v110, %v258
  %v263 = vmul.f32 %v115, %v258
  %v264 = vmul.f32 %v120, %v258
  %v265 = vmul.f32 %v125, %v258
  %v266 = vmul.f32 %v130, %v258
  %v267 = vmul.f32 %v135, %v258
  %v268 = vmul.f32 %v140, %v258
  %v269 = vmul.f32 %v145, %v258
  %v270 = vmul.f32 %v150, %v258
  %v271 = vmul.f32 %v155, %v258
  %v272 = vmul.f32 %v160, %v258
  %v273 = vmul.f32 %v165, %v258
  %v274 = vmul.f32 %v170, %v258
  %v275 = vmul.f32 %v175, %v258
  %v276 = vmul.f32 %v180, %v258
  %v277 = vmul.f32 %v185, %v258
  %v278 = vmul.f32 %v190, %v258
  %v279 = vmul.f32 %v195, %v258
  %v280 = vmul.f32 %v200, %v258
  %v281 = vmul.f32 %v205, %v258
  %v282 = vmul.f32 %v210, %v258
  %v283 = vmul.f32 %v215, %v258
  %v284 = vmul.f32 %v220, %v258
  %v285 = vmul.f32 %v225, %v258
  %v286 = vmul.f32 %v230, %v258
  %v287 = vmul.f32 %v235, %v258
  %v288 = vmul.f32 %v240, %v258
  %v289 = vmul.f32 %v245, %v258
  %v290 = vmul.f32 %v250, %v258
  %v291 = vmul.f32 %v255, %v258
  %v293 = vperm.slane %v89, 0
  %v295 = vadd.f32 %v260, %v293
  %v296 = vadd.f32 %v261, %v293
  %v297 = vadd.f32 %v262, %v293
  %v298 = vadd.f32 %v263, %v293
  %v299 = vadd.f32 %v264, %v293
  %v300 = vadd.f32 %v265, %v293
  %v301 = vadd.f32 %v266, %v293
  %v302 = vadd.f32 %v267, %v293
  %v303 = vadd.f32 %v268, %v293
  %v304 = vadd.f32 %v269, %v293
  %v305 = vadd.f32 %v270, %v293
  %v306 = vadd.f32 %v271, %v293
  %v307 = vadd.f32 %v272, %v293
  %v308 = vadd.f32 %v273, %v293
  %v309 = vadd.f32 %v274, %v293
  %v310 = vadd.f32 %v275, %v293
  %v311 = vadd.f32 %v276, %v293
  %v312 = vadd.f32 %v277, %v293
  %v313 = vadd.f32 %v278, %v293
  %v314 = vadd.f32 %v279, %v293
  %v315 = vadd.f32 %v280, %v293
  %v316 = vadd.f32 %v281, %v293
  %v317 = vadd.f32 %v282, %v293
  %v318 = vadd.f32 %v283, %v293
  %v319 = vadd.f32 %v284, %v293
  %v320 = vadd.f32 %v285, %v293
  %v321 = vadd.f32 %v286, %v293
  %v322 = vadd.f32 %v287, %v293
  %v323 = vadd.f32 %v288, %v293
  %v324 = vadd.f32 %v289, %v293
  %v325 = vadd.f32 %v290, %v293
  %v326 = vadd.f32 %v291, %v293
  %vm327 = vcmp.ge.f32.partialorder %v295, 0.0
  %vm328 = vcmp.ge.f32.partialorder %v296, 0.0
  %vm329 = vcmp.ge.f32.partialorder %v297, 0.0
  %vm330 = vcmp.ge.f32.partialorder %v298, 0.0
  %vm331 = vcmp.ge.f32.partialorder %v299, 0.0
  %vm332 = vcmp.ge.f32.partialorder %v300, 0.0
  %vm333 = vcmp.ge.f32.partialorder %v301, 0.0
  %vm334 = vcmp.ge.f32.partialorder %v302, 0.0
  %vm335 = vcmp.ge.f32.partialorder %v303, 0.0
  %vm336 = vcmp.ge.f32.partialorder %v304, 0.0
  %vm337 = vcmp.ge.f32.partialorder %v305, 0.0
  %vm338 = vcmp.ge.f32.partialorder %v306, 0.0
  %vm339 = vcmp.ge.f32.partialorder %v307, 0.0
  %vm340 = vcmp.ge.f32.partialorder %v308, 0.0
  %vm341 = vcmp.ge.f32.partialorder %v309, 0.0
  %vm342 = vcmp.ge.f32.partialorder %v310, 0.0
  %vm343 = vcmp.ge.f32.partialorder %v311, 0.0
  %vm344 = vcmp.ge.f32.partialorder %v312, 0.0
  %vm345 = vcmp.ge.f32.partialorder %v313, 0.0
  %vm346 = vcmp.ge.f32.partialorder %v314, 0.0
  %vm347 = vcmp.ge.f32.partialorder %v315, 0.0
  %vm348 = vcmp.ge.f32.partialorder %v316, 0.0
  %vm349 = vcmp.ge.f32.partialorder %v317, 0.0
  %vm350 = vcmp.ge.f32.partialorder %v318, 0.0
  %vm351 = vcmp.ge.f32.partialorder %v319, 0.0
  %vm352 = vcmp.ge.f32.partialorder %v320, 0.0
  %vm353 = vcmp.ge.f32.partialorder %v321, 0.0
  %vm354 = vcmp.ge.f32.partialorder %v322, 0.0
  %vm355 = vcmp.ge.f32.partialorder %v323, 0.0
  %vm356 = vcmp.ge.f32.partialorder %v324, 0.0
  %vm357 = vcmp.ge.f32.partialorder %v325, 0.0
  %vm358 = vcmp.ge.f32.partialorder %v326, 0.0
  %v359 = vmul.f32 %v295, 0.2
  %v360 = vmul.f32 %v296, 0.2
  %v361 = vmul.f32 %v297, 0.2
  %v362 = vmul.f32 %v298, 0.2
  %v363 = vmul.f32 %v299, 0.2
  %v364 = vmul.f32 %v300, 0.2
  %v365 = vmul.f32 %v301, 0.2
  %v366 = vmul.f32 %v302, 0.2
  %v367 = vmul.f32 %v303, 0.2
  %v368 = vmul.f32 %v304, 0.2
  %v369 = vmul.f32 %v305, 0.2
  %v370 = vmul.f32 %v306, 0.2
  %v371 = vmul.f32 %v307, 0.2
  %v372 = vmul.f32 %v308, 0.2
  %v373 = vmul.f32 %v309, 0.2
  %v374 = vmul.f32 %v310, 0.2
  %v375 = vmul.f32 %v311, 0.2
  %v376 = vmul.f32 %v312, 0.2
  %v377 = vmul.f32 %v313, 0.2
  %v378 = vmul.f32 %v314, 0.2
  %v379 = vmul.f32 %v315, 0.2
  %v380 = vmul.f32 %v316, 0.2
  %v381 = vmul.f32 %v317, 0.2
  %v382 = vmul.f32 %v318, 0.2
  %v383 = vmul.f32 %v319, 0.2
  %v384 = vmul.f32 %v320, 0.2
  %v385 = vmul.f32 %v321, 0.2
  %v386 = vmul.f32 %v322, 0.2
  %v387 = vmul.f32 %v323, 0.2
  %v388 = vmul.f32 %v324, 0.2
  %v389 = vmul.f32 %v325, 0.2
  %v390 = vmul.f32 %v326, 0.2
  %v391 = vsel %vm327, %v295, %v359
  %v392 = vsel %vm328, %v296, %v360
  %v393 = vsel %vm329, %v297, %v361
  %v394 = vsel %vm330, %v298, %v362
  %v395 = vsel %vm331, %v299, %v363
  %v396 = vsel %vm332, %v300, %v364
  %v397 = vsel %vm333, %v301, %v365
  %v398 = vsel %vm334, %v302, %v366
  %v399 = vsel %vm335, %v303, %v367
  %v400 = vsel %vm336, %v304, %v368
  %v401 = vsel %vm337, %v305, %v369
  %v402 = vsel %vm338, %v306, %v370
  %v403 = vsel %vm339, %v307, %v371
  %v404 = vsel %vm340, %v308, %v372
  %v405 = vsel %vm341, %v309, %v373
  %v406 = vsel %vm342, %v310, %v374
  %v407 = vsel %vm343, %v311, %v375
  %v408 = vsel %vm344, %v312, %v376
  %v409 = vsel %vm345, %v313, %v377
  %v410 = vsel %vm346, %v314, %v378
  %v411 = vsel %vm347, %v315, %v379
  %v412 = vsel %vm348, %v316, %v380
  %v413 = vsel %vm349, %v317, %v381
  %v414 = vsel %vm350, %v318, %v382
  %v415 = vsel %vm351, %v319, %v383
  %v416 = vsel %vm352, %v320, %v384
  %v417 = vsel %vm353, %v321, %v385
  %v418 = vsel %vm354, %v322, %v386
  %v419 = vsel %vm355, %v323, %v387
  %v420 = vsel %vm356, %v324, %v388
  %v421 = vsel %vm357, %v325, %v389
  %v422 = vsel %vm358, %v326, %v390
  %v423 = vld [vmem:[%s3] sm:$0xff]
  %v424 = vld [vmem:[%s3 + $0x8] sm:$0x3]
  %v426 = vperm.slane %v90, 0
  %vm428 = vcmask 80896
  %v430 = vsel %vm428, %v56, 0
  %v433 = vsel %vm428, %v57, 0
  %v436 = vsel %vm428, %v58, 0
  %v439 = vsel %vm428, %v59, 0
  %v442 = vsel %vm428, %v60, 0
  %v445 = vsel %vm428, %v61, 0
  %v448 = vsel %vm428, %v62, 0
  %v451 = vsel %vm428, %v63, 0
  %v454 = vsel %vm428, %v64, 0
  %v457 = vsel %vm428, %v65, 0
  %v460 = vsel %vm428, %v66, 0
  %v463 = vsel %vm428, %v67, 0
  %v466 = vsel %vm428, %v68, 0
  %v469 = vsel %vm428, %v69, 0
  %v472 = vsel %vm428, %v70, 0
  %v475 = vsel %vm428, %v71, 0
  %v478 = vsel %vm428, %v72, 0
  %v481 = vsel %vm428, %v73, 0
  %v484 = vsel %vm428, %v74, 0
  %v487 = vsel %vm428, %v75, 0
  %v490 = vsel %vm428, %v76, 0
  %v493 = vsel %vm428, %v77, 0
  %v496 = vsel %vm428, %v78, 0
  %v499 = vsel %vm428, %v79, 0
  %v502 = vsel %vm428, %v80, 0
  %v505 = vsel %vm428, %v81, 0
  %v508 = vsel %vm428, %v82, 0
  %v511 = vsel %vm428, %v83, 0
  %v514 = vsel %vm428, %v84, 0
  %v517 = vsel %vm428, %v85, 0
  %v520 = vsel %vm428, %v86, 0
  %v523 = vsel %vm428, %v87, 0
  %vm525 = vcmask 1041408
  %v527 = vsel %vm525, %v424, 0
  %529 = vmatpush.msra.mxu0 0.0
  %530 = vmatpush.msra.mxu0 0.0
  %531 = vmatpush.msra.mxu0 0.0
  %532 = vmatpush.msra.mxu0 0.0
  %533 = vmatpush.msra.mxu0 0.0
  %534 = vmatpush.msra.mxu0 0.0
  %535 = vmatpush.msra.mxu0 0.0
  %536 = vmatpush.msra.mxu0 0.0
  %537 = vmatpush.msra.mxu0 0.0
  %538 = vmatpush.msra.mxu0 0.0
  %539 = vmatpush.msra.mxu0 0.0
  %540 = vmatpush.msra.mxu0 0.0
  %541 = vmatpush.msra.mxu0 0.0
  %542 = vmatpush.msra.mxu0 0.0
  %543 = vmatpush.msra.mxu0 %v527
  %544 = vmatpush.msra.mxu0 %v423
  %545 = vmatmul.f32.gmra.mxu0 %v430
  %v546 = vpop.f32.mrf.mxu0
  %v547 = vadd.f32 %v426, %v546
  %548 = vmatmul.f32.gmra.mxu0 %v433
  %v549 = vpop.f32.mrf.mxu0
  %v550 = vadd.f32 %v426, %v549
  %551 = vmatmul.f32.gmra.mxu0 %v436
  %v552 = vpop.f32.mrf.mxu0
  %v553 = vadd.f32 %v426, %v552
  %554 = vmatmul.f32.gmra.mxu0 %v439
  %v555 = vpop.f32.mrf.mxu0
  %v556 = vadd.f32 %v426, %v555
  %557 = vmatmul.f32.gmra.mxu0 %v442
  %v558 = vpop.f32.mrf.mxu0
  %v559 = vadd.f32 %v426, %v558
  %560 = vmatmul.f32.gmra.mxu0 %v445
  %v561 = vpop.f32.mrf.mxu0
  %v562 = vadd.f32 %v426, %v561
  %563 = vmatmul.f32.gmra.mxu0 %v448
  %v564 = vpop.f32.mrf.mxu0
  %v565 = vadd.f32 %v426, %v564
  %566 = vmatmul.f32.gmra.mxu0 %v451
  %v567 = vpop.f32.mrf.mxu0
  %v568 = vadd.f32 %v426, %v567
  %569 = vmatmul.f32.gmra.mxu0 %v454
  %v570 = vpop.f32.mrf.mxu0
  %v571 = vadd.f32 %v426, %v570
  %572 = vmatmul.f32.gmra.mxu0 %v457
  %v573 = vpop.f32.mrf.mxu0
  %v574 = vadd.f32 %v426, %v573
  %575 = vmatmul.f32.gmra.mxu0 %v460
  %v576 = vpop.f32.mrf.mxu0
  %v577 = vadd.f32 %v426, %v576
  %578 = vmatmul.f32.gmra.mxu0 %v463
  %v579 = vpop.f32.mrf.mxu0
  %v580 = vadd.f32 %v426, %v579
  %581 = vmatmul.f32.gmra.mxu0 %v466
  %v582 = vpop.f32.mrf.mxu0
  %v583 = vadd.f32 %v426, %v582
  %584 = vmatmul.f32.gmra.mxu0 %v469
  %v585 = vpop.f32.mrf.mxu0
  %v586 = vadd.f32 %v426, %v585
  %587 = vmatmul.f32.gmra.mxu0 %v472
  %v588 = vpop.f32.mrf.mxu0
  %v589 = vadd.f32 %v426, %v588
  %590 = vmatmul.f32.gmra.mxu0 %v475
  %v591 = vpop.f32.mrf.mxu0
  %v592 = vadd.f32 %v426, %v591
  %593 = vmatmul.f32.gmra.mxu0 %v478
  %v594 = vpop.f32.mrf.mxu0
  %v595 = vadd.f32 %v426, %v594
  %596 = vmatmul.f32.gmra.mxu0 %v481
  %v597 = vpop.f32.mrf.mxu0
  %v598 = vadd.f32 %v426, %v597
  %599 = vmatmul.f32.gmra.mxu0 %v484
  %v600 = vpop.f32.mrf.mxu0
  %v601 = vadd.f32 %v426, %v600
  %602 = vmatmul.f32.gmra.mxu0 %v487
  %v603 = vpop.f32.mrf.mxu0
  %v604 = vadd.f32 %v426, %v603
  %605 = vmatmul.f32.gmra.mxu0 %v490
  %v606 = vpop.f32.mrf.mxu0
  %v607 = vadd.f32 %v426, %v606
  %608 = vmatmul.f32.gmra.mxu0 %v493
  %v609 = vpop.f32.mrf.mxu0
  %v610 = vadd.f32 %v426, %v609
  %611 = vmatmul.f32.gmra.mxu0 %v496
  %v612 = vpop.f32.mrf.mxu0
  %v613 = vadd.f32 %v426, %v612
  %614 = vmatmul.f32.gmra.mxu0 %v499
  %v615 = vpop.f32.mrf.mxu0
  %v616 = vadd.f32 %v426, %v615
  %617 = vmatmul.f32.gmra.mxu0 %v502
  %v618 = vpop.f32.mrf.mxu0
  %v619 = vadd.f32 %v426, %v618
  %620 = vmatmul.f32.gmra.mxu0 %v505
  %v621 = vpop.f32.mrf.mxu0
  %v622 = vadd.f32 %v426, %v621
  %623 = vmatmul.f32.gmra.mxu0 %v508
  %v624 = vpop.f32.mrf.mxu0
  %v625 = vadd.f32 %v426, %v624
  %626 = vmatmul.f32.gmra.mxu0 %v511
  %v627 = vpop.f32.mrf.mxu0
  %v628 = vadd.f32 %v426, %v627
  %629 = vmatmul.f32.gmra.mxu0 %v514
  %v630 = vpop.f32.mrf.mxu0
  %v631 = vadd.f32 %v426, %v630
  %632 = vmatmul.f32.gmra.mxu0 %v517
  %v633 = vpop.f32.mrf.mxu0
  %v634 = vadd.f32 %v426, %v633
  %635 = vmatmul.f32.gmra.mxu0 %v520
  %v636 = vpop.f32.mrf.mxu0
  %v637 = vadd.f32 %v426, %v636
  %638 = vmatmul.f32.gmra.mxu0 %v523
  %v639 = vpop.f32.mrf.mxu0
  %v640 = vadd.f32 %v426, %v639
  %641 = vdwg.mxu0
  %vm642 = vcmp.ge.f32.partialorder %v547, 0.0
  %vm643 = vcmp.ge.f32.partialorder %v550, 0.0
  %vm644 = vcmp.ge.f32.partialorder %v553, 0.0
  %vm645 = vcmp.ge.f32.partialorder %v556, 0.0
  %vm646 = vcmp.ge.f32.partialorder %v559, 0.0
  %vm647 = vcmp.ge.f32.partialorder %v562, 0.0
  %vm648 = vcmp.ge.f32.partialorder %v565, 0.0
  %vm649 = vcmp.ge.f32.partialorder %v568, 0.0
  %vm650 = vcmp.ge.f32.partialorder %v571, 0.0
  %vm651 = vcmp.ge.f32.partialorder %v574, 0.0
  %vm652 = vcmp.ge.f32.partialorder %v577, 0.0
  %vm653 = vcmp.ge.f32.partialorder %v580, 0.0
  %vm654 = vcmp.ge.f32.partialorder %v583, 0.0
  %vm655 = vcmp.ge.f32.partialorder %v586, 0.0
  %vm656 = vcmp.ge.f32.partialorder %v589, 0.0
  %vm657 = vcmp.ge.f32.partialorder %v592, 0.0
  %vm658 = vcmp.ge.f32.partialorder %v595, 0.0
  %vm659 = vcmp.ge.f32.partialorder %v598, 0.0
  %vm660 = vcmp.ge.f32.partialorder %v601, 0.0
  %vm661 = vcmp.ge.f32.partialorder %v604, 0.0
  %vm662 = vcmp.ge.f32.partialorder %v607, 0.0
  %vm663 = vcmp.ge.f32.partialorder %v610, 0.0
  %vm664 = vcmp.ge.f32.partialorder %v613, 0.0
  %vm665 = vcmp.ge.f32.partialorder %v616, 0.0
  %vm666 = vcmp.ge.f32.partialorder %v619, 0.0
  %vm667 = vcmp.ge.f32.partialorder %v622, 0.0
  %vm668 = vcmp.ge.f32.partialorder %v625, 0.0
  %vm669 = vcmp.ge.f32.partialorder %v628, 0.0
  %vm670 = vcmp.ge.f32.partialorder %v631, 0.0
  %vm671 = vcmp.ge.f32.partialorder %v634, 0.0
  %vm672 = vcmp.ge.f32.partialorder %v637, 0.0
  %vm673 = vcmp.ge.f32.partialorder %v640, 0.0
  %v674 = vmul.f32 %v547, 0.2
  %v675 = vmul.f32 %v550, 0.2
  %v676 = vmul.f32 %v553, 0.2
  %v677 = vmul.f32 %v556, 0.2
  %v678 = vmul.f32 %v559, 0.2
  %v679 = vmul.f32 %v562, 0.2
  %v680 = vmul.f32 %v565, 0.2
  %v681 = vmul.f32 %v568, 0.2
  %v682 = vmul.f32 %v571, 0.2
  %v683 = vmul.f32 %v574, 0.2
  %v684 = vmul.f32 %v577, 0.2
  %v685 = vmul.f32 %v580, 0.2
  %v686 = vmul.f32 %v583, 0.2
  %v687 = vmul.f32 %v586, 0.2
  %v688 = vmul.f32 %v589, 0.2
  %v689 = vmul.f32 %v592, 0.2
  %v690 = vmul.f32 %v595, 0.2
  %v691 = vmul.f32 %v598, 0.2
  %v692 = vmul.f32 %v601, 0.2
  %v693 = vmul.f32 %v604, 0.2
  %v694 = vmul.f32 %v607, 0.2
  %v695 = vmul.f32 %v610, 0.2
  %v696 = vmul.f32 %v613, 0.2
  %v697 = vmul.f32 %v616, 0.2
  %v698 = vmul.f32 %v619, 0.2
  %v699 = vmul.f32 %v622, 0.2
  %v700 = vmul.f32 %v625, 0.2
  %v701 = vmul.f32 %v628, 0.2
  %v702 = vmul.f32 %v631, 0.2
  %v703 = vmul.f32 %v634, 0.2
  %v704 = vmul.f32 %v637, 0.2
  %v705 = vmul.f32 %v640, 0.2
  %v706 = vsel %vm642, %v547, %v674
  %v707 = vsel %vm643, %v550, %v675
  %v708 = vsel %vm644, %v553, %v676
  %v709 = vsel %vm645, %v556, %v677
  %v710 = vsel %vm646, %v559, %v678
  %v711 = vsel %vm647, %v562, %v679
  %v712 = vsel %vm648, %v565, %v680
  %v713 = vsel %vm649, %v568, %v681
  %v714 = vsel %vm650, %v571, %v682
  %v715 = vsel %vm651, %v574, %v683
  %v716 = vsel %vm652, %v577, %v684
  %v717 = vsel %vm653, %v580, %v685
  %v718 = vsel %vm654, %v583, %v686
  %v719 = vsel %vm655, %v586, %v687
  %v720 = vsel %vm656, %v589, %v688
  %v721 = vsel %vm657, %v592, %v689
  %v722 = vsel %vm658, %v595, %v690
  %v723 = vsel %vm659, %v598, %v691
  %v724 = vsel %vm660, %v601, %v692
  %v725 = vsel %vm661, %v604, %v693
  %v726 = vsel %vm662, %v607, %v694
  %v727 = vsel %vm663, %v610, %v695
  %v728 = vsel %vm664, %v613, %v696
  %v729 = vsel %vm665, %v616, %v697
  %v730 = vsel %vm666, %v619, %v698
  %v731 = vsel %vm667, %v622, %v699
  %v732 = vsel %vm668, %v625, %v700
  %v733 = vsel %vm669, %v628, %v701
  %v734 = vsel %vm670, %v631, %v702
  %v735 = vsel %vm671, %v634, %v703
  %v736 = vsel %vm672, %v637, %v704
  %v737 = vsel %vm673, %v640, %v705
  %v738 = vpack.c.bf16 %v392, %v391
  %v739 = vpack.c.bf16 %v394, %v393
  %v740 = vpack.c.bf16 %v396, %v395
  %v741 = vpack.c.bf16 %v398, %v397
  %v742 = vpack.c.bf16 %v400, %v399
  %v743 = vpack.c.bf16 %v402, %v401
  %v744 = vpack.c.bf16 %v404, %v403
  %v745 = vpack.c.bf16 %v406, %v405
  %v746 = vpack.c.bf16 %v408, %v407
  %v747 = vpack.c.bf16 %v410, %v409
  %v748 = vpack.c.bf16 %v412, %v411
  %v749 = vpack.c.bf16 %v414, %v413
  %v750 = vpack.c.bf16 %v416, %v415
  %v751 = vpack.c.bf16 %v418, %v417
  %v752 = vpack.c.bf16 %v420, %v419
  %v753 = vpack.c.bf16 %v422, %v421
  %v754 = vld [vmem:[%s4] sm:$0xf]
  %v755 = vld [vmem:[%s4 + $0x4] sm:$0xf]
  %v756 = vld [vmem:[%s4 + $0x8] sm:$0xf]
  %v757 = vld [vmem:[%s4 + $0xc] sm:$0xf]
  %v758 = vld [vmem:[%s4 + $0x10] sm:$0xf]
  %v759 = vld [vmem:[%s4 + $0x14] sm:$0xf]
  %v760 = vld [vmem:[%s4 + $0x18] sm:$0xf]
  %v761 = vld [vmem:[%s4 + $0x1c] sm:$0xf]
  %v762 = vld [vmem:[%s4 + $0x20] sm:$0xf]
  %v763 = vld [vmem:[%s4 + $0x24] sm:$0xf]
  %v764 = vld [vmem:[%s4 + $0x28] sm:$0xf]
  %v765 = vld [vmem:[%s4 + $0x2c] sm:$0xf]
  %v766 = vld [vmem:[%s4 + $0x30] sm:$0xf]
  %v767 = vld [vmem:[%s4 + $0x34] sm:$0xf]
  %v768 = vld [vmem:[%s4 + $0x38] sm:$0xf]
  %v769 = vld [vmem:[%s4 + $0x3c] sm:$0xf]
  %v770 = vpack.c.bf16 %v707, %v706
  %v771 = vpack.c.bf16 %v709, %v708
  %v772 = vpack.c.bf16 %v711, %v710
  %v773 = vpack.c.bf16 %v713, %v712
  %v774 = vpack.c.bf16 %v715, %v714
  %v775 = vpack.c.bf16 %v717, %v716
  %v776 = vpack.c.bf16 %v719, %v718
  %v777 = vpack.c.bf16 %v721, %v720
  %v778 = vpack.c.bf16 %v723, %v722
  %v779 = vpack.c.bf16 %v725, %v724
  %v780 = vpack.c.bf16 %v727, %v726
  %v781 = vpack.c.bf16 %v729, %v728
  %v782 = vpack.c.bf16 %v731, %v730
  %v783 = vpack.c.bf16 %v733, %v732
  %v784 = vpack.c.bf16 %v735, %v734
  %v785 = vpack.c.bf16 %v737, %v736
  %v786 = vld [vmem:[%s4 + $0x40] sm:$0xf]
  %v787 = vld [vmem:[%s4 + $0x44] sm:$0xf]
  %v788 = vld [vmem:[%s4 + $0x48] sm:$0xf]
  %v789 = vld [vmem:[%s4 + $0x4c] sm:$0xf]
  %v790 = vld [vmem:[%s4 + $0x50] sm:$0xf]
  %v791 = vld [vmem:[%s4 + $0x54] sm:$0xf]
  %v792 = vld [vmem:[%s4 + $0x58] sm:$0xf]
  %v793 = vld [vmem:[%s4 + $0x5c] sm:$0xf]
  %v794 = vld [vmem:[%s4 + $0x60] sm:$0xf]
  %v795 = vld [vmem:[%s4 + $0x64] sm:$0xf]
  %v796 = vld [vmem:[%s4 + $0x68] sm:$0xf]
  %v797 = vld [vmem:[%s4 + $0x6c] sm:$0xf]
  %v798 = vld [vmem:[%s4 + $0x70] sm:$0xf]
  %v799 = vld [vmem:[%s4 + $0x74] sm:$0xf]
  %v800 = vld [vmem:[%s4 + $0x78] sm:$0xf]
  %v801 = vld [vmem:[%s4 + $0x7c] sm:$0xf]
  %v818 = vunpack.c.l.b16 %v786
  %v819 = vunpack.c.l.b16 %v787
  %v820 = vunpack.c.l.b16 %v788
  %v821 = vunpack.c.l.b16 %v789
  %v822 = vunpack.c.l.b16 %v790
  %v823 = vunpack.c.l.b16 %v791
  %v824 = vunpack.c.l.b16 %v792
  %v825 = vunpack.c.l.b16 %v793
  %v826 = vunpack.c.l.b16 %v794
  %v827 = vunpack.c.l.b16 %v795
  %v828 = vunpack.c.l.b16 %v796
  %v829 = vunpack.c.l.b16 %v797
  %v830 = vunpack.c.l.b16 %v798
  %v831 = vunpack.c.l.b16 %v799
  %v832 = vunpack.c.l.b16 %v800
  %v833 = vunpack.c.l.b16 %v801
  %v834 = vpack.c.b16 %v819, %v818
  %v835 = vpack.c.b16 %v821, %v820
  %v836 = vpack.c.b16 %v823, %v822
  %v837 = vpack.c.b16 %v825, %v824
  %v838 = vpack.c.b16 %v827, %v826
  %v839 = vpack.c.b16 %v829, %v828
  %v840 = vpack.c.b16 %v831, %v830
  %v841 = vpack.c.b16 %v833, %v832
  %850 = vmatpush.bf16.msra.mxu0 %v841
  %851 = vmatpush.bf16.msra.mxu0 %v840
  %852 = vmatpush.bf16.msra.mxu0 %v839
  %853 = vmatpush.bf16.msra.mxu0 %v838
  %854 = vmatpush.bf16.msra.mxu0 %v837
  %855 = vmatpush.bf16.msra.mxu0 %v836
  %856 = vmatpush.bf16.msra.mxu0 %v835
  %857 = vmatpush.bf16.msra.mxu0 %v834
  %858 = vmatmul.bf16.gmra.mxu0 %v770
  %v859 = vpop.f32.mrf.mxu0
  %v860 = vadd.f32 0.0, %v859
  %v861 = vpop.f32.mrf.mxu0
  %v862 = vadd.f32 0.0, %v861
  %863 = vmatmul.bf16.gmra.mxu0 %v771
  %v864 = vpop.f32.mrf.mxu0
  %v865 = vadd.f32 0.0, %v864
  %v866 = vpop.f32.mrf.mxu0
  %v867 = vadd.f32 0.0, %v866
  %868 = vmatmul.bf16.gmra.mxu0 %v772
  %v869 = vpop.f32.mrf.mxu0
  %v870 = vadd.f32 0.0, %v869
  %v871 = vpop.f32.mrf.mxu0
  %v872 = vadd.f32 0.0, %v871
  %873 = vmatmul.bf16.gmra.mxu0 %v773
  %v874 = vpop.f32.mrf.mxu0
  %v875 = vadd.f32 0.0, %v874
  %v876 = vpop.f32.mrf.mxu0
  %v877 = vadd.f32 0.0, %v876
  %878 = vmatmul.bf16.gmra.mxu0 %v774
  %v879 = vpop.f32.mrf.mxu0
  %v880 = vadd.f32 0.0, %v879
  %v881 = vpop.f32.mrf.mxu0
  %v882 = vadd.f32 0.0, %v881
  %883 = vmatmul.bf16.gmra.mxu0 %v775
  %v884 = vpop.f32.mrf.mxu0
  %v885 = vadd.f32 0.0, %v884
  %v886 = vpop.f32.mrf.mxu0
  %v887 = vadd.f32 0.0, %v886
  %888 = vmatmul.bf16.gmra.mxu0 %v776
  %v889 = vpop.f32.mrf.mxu0
  %v890 = vadd.f32 0.0, %v889
  %v891 = vpop.f32.mrf.mxu0
  %v892 = vadd.f32 0.0, %v891
  %893 = vmatmul.bf16.gmra.mxu0 %v777
  %v894 = vpop.f32.mrf.mxu0
  %v895 = vadd.f32 0.0, %v894
  %v896 = vpop.f32.mrf.mxu0
  %v897 = vadd.f32 0.0, %v896
  %898 = vmatmul.bf16.gmra.mxu0 %v778
  %v899 = vpop.f32.mrf.mxu0
  %v900 = vadd.f32 0.0, %v899
  %v901 = vpop.f32.mrf.mxu0
  %v902 = vadd.f32 0.0, %v901
  %903 = vmatmul.bf16.gmra.mxu0 %v779
  %v904 = vpop.f32.mrf.mxu0
  %v905 = vadd.f32 0.0, %v904
  %v906 = vpop.f32.mrf.mxu0
  %v907 = vadd.f32 0.0, %v906
  %908 = vmatmul.bf16.gmra.mxu0 %v780
  %v909 = vpop.f32.mrf.mxu0
  %v910 = vadd.f32 0.0, %v909
  %v911 = vpop.f32.mrf.mxu0
  %v912 = vadd.f32 0.0, %v911
  %913 = vmatmul.bf16.gmra.mxu0 %v781
  %v914 = vpop.f32.mrf.mxu0
  %v915 = vadd.f32 0.0, %v914
  %v916 = vpop.f32.mrf.mxu0
  %v917 = vadd.f32 0.0, %v916
  %918 = vmatmul.bf16.gmra.mxu0 %v782
  %v919 = vpop.f32.mrf.mxu0
  %v920 = vadd.f32 0.0, %v919
  %v921 = vpop.f32.mrf.mxu0
  %v922 = vadd.f32 0.0, %v921
  %923 = vmatmul.bf16.gmra.mxu0 %v783
  %v924 = vpop.f32.mrf.mxu0
  %v925 = vadd.f32 0.0, %v924
  %v926 = vpop.f32.mrf.mxu0
  %v927 = vadd.f32 0.0, %v926
  %928 = vmatmul.bf16.gmra.mxu0 %v784
  %v929 = vpop.f32.mrf.mxu0
  %v930 = vadd.f32 0.0, %v929
  %v931 = vpop.f32.mrf.mxu0
  %v932 = vadd.f32 0.0, %v931
  %933 = vmatmul.bf16.gmra.mxu0 %v785
  %v934 = vpop.f32.mrf.mxu0
  %v935 = vadd.f32 0.0, %v934
  %v936 = vpop.f32.mrf.mxu0
  %v937 = vadd.f32 0.0, %v936
  %938 = vdwg.mxu0
  %v955 = vunpack.c.l.b16 %v754
  %v956 = vunpack.c.l.b16 %v755
  %v957 = vunpack.c.l.b16 %v756
  %v958 = vunpack.c.l.b16 %v757
  %v959 = vunpack.c.l.b16 %v758
  %v960 = vunpack.c.l.b16 %v759
  %v961 = vunpack.c.l.b16 %v760
  %v962 = vunpack.c.l.b16 %v761
  %v963 = vunpack.c.l.b16 %v762
  %v964 = vunpack.c.l.b16 %v763
  %v965 = vunpack.c.l.b16 %v764
  %v966 = vunpack.c.l.b16 %v765
  %v967 = vunpack.c.l.b16 %v766
  %v968 = vunpack.c.l.b16 %v767
  %v969 = vunpack.c.l.b16 %v768
  %v970 = vunpack.c.l.b16 %v769
  %v971 = vpack.c.b16 %v956, %v955
  %v972 = vpack.c.b16 %v958, %v957
  %v973 = vpack.c.b16 %v960, %v959
  %v974 = vpack.c.b16 %v962, %v961
  %v975 = vpack.c.b16 %v964, %v963
  %v976 = vpack.c.b16 %v966, %v965
  %v977 = vpack.c.b16 %v968, %v967
  %v978 = vpack.c.b16 %v970, %v969
  %987 = vmatpush.bf16.msra.mxu0 %v978
  %988 = vmatpush.bf16.msra.mxu0 %v977
  %989 = vmatpush.bf16.msra.mxu0 %v976
  %990 = vmatpush.bf16.msra.mxu0 %v975
  %991 = vmatpush.bf16.msra.mxu0 %v974
  %992 = vmatpush.bf16.msra.mxu0 %v973
  %993 = vmatpush.bf16.msra.mxu0 %v972
  %994 = vmatpush.bf16.msra.mxu0 %v971
  %995 = vmatmul.bf16.gmra.mxu0 %v738
  %v996 = vpop.f32.mrf.mxu0
  %v997 = vadd.f32 %v860, %v996
  %v998 = vpop.f32.mrf.mxu0
  %v999 = vadd.f32 %v862, %v998
  %1000 = vmatmul.bf16.gmra.mxu0 %v739
  %v1001 = vpop.f32.mrf.mxu0
  %v1002 = vadd.f32 %v865, %v1001
  %v1003 = vpop.f32.mrf.mxu0
  %v1004 = vadd.f32 %v867, %v1003
  %1005 = vmatmul.bf16.gmra.mxu0 %v740
  %v1006 = vpop.f32.mrf.mxu0
  %v1007 = vadd.f32 %v870, %v1006
  %v1008 = vpop.f32.mrf.mxu0
  %v1009 = vadd.f32 %v872, %v1008
  %1010 = vmatmul.bf16.gmra.mxu0 %v741
  %v1011 = vpop.f32.mrf.mxu0
  %v1012 = vadd.f32 %v875, %v1011
  %v1013 = vpop.f32.mrf.mxu0
  %v1014 = vadd.f32 %v877, %v1013
  %1015 = vmatmul.bf16.gmra.mxu0 %v742
  %v1016 = vpop.f32.mrf.mxu0
  %v1017 = vadd.f32 %v880, %v1016
  %v1018 = vpop.f32.mrf.mxu0
  %v1019 = vadd.f32 %v882, %v1018
  %1020 = vmatmul.bf16.gmra.mxu0 %v743
  %v1021 = vpop.f32.mrf.mxu0
  %v1022 = vadd.f32 %v885, %v1021
  %v1023 = vpop.f32.mrf.mxu0
  %v1024 = vadd.f32 %v887, %v1023
  %1025 = vmatmul.bf16.gmra.mxu0 %v744
  %v1026 = vpop.f32.mrf.mxu0
  %v1027 = vadd.f32 %v890, %v1026
  %v1028 = vpop.f32.mrf.mxu0
  %v1029 = vadd.f32 %v892, %v1028
  %1030 = vmatmul.bf16.gmra.mxu0 %v745
  %v1031 = vpop.f32.mrf.mxu0
  %v1032 = vadd.f32 %v895, %v1031
  %v1033 = vpop.f32.mrf.mxu0
  %v1034 = vadd.f32 %v897, %v1033
  %1035 = vmatmul.bf16.gmra.mxu0 %v746
  %v1036 = vpop.f32.mrf.mxu0
  %v1037 = vadd.f32 %v900, %v1036
  %v1038 = vpop.f32.mrf.mxu0
  %v1039 = vadd.f32 %v902, %v1038
  %1040 = vmatmul.bf16.gmra.mxu0 %v747
  %v1041 = vpop.f32.mrf.mxu0
  %v1042 = vadd.f32 %v905, %v1041
  %v1043 = vpop.f32.mrf.mxu0
  %v1044 = vadd.f32 %v907, %v1043
  %1045 = vmatmul.bf16.gmra.mxu0 %v748
  %v1046 = vpop.f32.mrf.mxu0
  %v1047 = vadd.f32 %v910, %v1046
  %v1048 = vpop.f32.mrf.mxu0
  %v1049 = vadd.f32 %v912, %v1048
  %1050 = vmatmul.bf16.gmra.mxu0 %v749
  %v1051 = vpop.f32.mrf.mxu0
  %v1052 = vadd.f32 %v915, %v1051
  %v1053 = vpop.f32.mrf.mxu0
  %v1054 = vadd.f32 %v917, %v1053
  %1055 = vmatmul.bf16.gmra.mxu0 %v750
  %v1056 = vpop.f32.mrf.mxu0
  %v1057 = vadd.f32 %v920, %v1056
  %v1058 = vpop.f32.mrf.mxu0
  %v1059 = vadd.f32 %v922, %v1058
  %1060 = vmatmul.bf16.gmra.mxu0 %v751
  %v1061 = vpop.f32.mrf.mxu0
  %v1062 = vadd.f32 %v925, %v1061
  %v1063 = vpop.f32.mrf.mxu0
  %v1064 = vadd.f32 %v927, %v1063
  %1065 = vmatmul.bf16.gmra.mxu0 %v752
  %v1066 = vpop.f32.mrf.mxu0
  %v1067 = vadd.f32 %v930, %v1066
  %v1068 = vpop.f32.mrf.mxu0
  %v1069 = vadd.f32 %v932, %v1068
  %1070 = vmatmul.bf16.gmra.mxu0 %v753
  %v1071 = vpop.f32.mrf.mxu0
  %v1072 = vadd.f32 %v935, %v1071
  %v1073 = vpop.f32.mrf.mxu0
  %v1074 = vadd.f32 %v937, %v1073
  %1075 = vdwg.mxu0
  %vm1076 = vcmask 523264
  %v1077 = vsel %vm1076, %v997, 0.0
  %v1078 = vsel %vm1076, %v999, 0.0
  %v1079 = vadd.f32 %v1077, %v1078
  %v1080 = vsel %vm1076, %v1002, 0.0
  %v1081 = vadd.f32 %v1079, %v1080
  %v1082 = vsel %vm1076, %v1004, 0.0
  %v1083 = vadd.f32 %v1081, %v1082
  %v1084 = vsel %vm1076, %v1007, 0.0
  %v1085 = vadd.f32 %v1083, %v1084
  %v1086 = vsel %vm1076, %v1009, 0.0
  %v1087 = vadd.f32 %v1085, %v1086
  %v1088 = vsel %vm1076, %v1012, 0.0
  %v1089 = vadd.f32 %v1087, %v1088
  %v1090 = vsel %vm1076, %v1014, 0.0
  %v1091 = vadd.f32 %v1089, %v1090
  %v1092 = vsel %vm1076, %v1017, 0.0
  %v1093 = vadd.f32 %v1091, %v1092
  %v1094 = vsel %vm1076, %v1019, 0.0
  %v1095 = vadd.f32 %v1093, %v1094
  %v1096 = vsel %vm1076, %v1022, 0.0
  %v1097 = vadd.f32 %v1095, %v1096
  %v1098 = vsel %vm1076, %v1024, 0.0
  %v1099 = vadd.f32 %v1097, %v1098
  %v1100 = vsel %vm1076, %v1027, 0.0
  %v1101 = vadd.f32 %v1099, %v1100
  %v1102 = vsel %vm1076, %v1029, 0.0
  %v1103 = vadd.f32 %v1101, %v1102
  %v1104 = vsel %vm1076, %v1032, 0.0
  %v1105 = vadd.f32 %v1103, %v1104
  %v1106 = vsel %vm1076, %v1034, 0.0
  %v1107 = vadd.f32 %v1105, %v1106
  %v1108 = vsel %vm1076, %v1037, 0.0
  %v1109 = vadd.f32 %v1107, %v1108
  %v1110 = vsel %vm1076, %v1039, 0.0
  %v1111 = vadd.f32 %v1109, %v1110
  %v1112 = vsel %vm1076, %v1042, 0.0
  %v1113 = vadd.f32 %v1111, %v1112
  %v1114 = vsel %vm1076, %v1044, 0.0
  %v1115 = vadd.f32 %v1113, %v1114
  %v1116 = vsel %vm1076, %v1047, 0.0
  %v1117 = vadd.f32 %v1115, %v1116
  %v1118 = vsel %vm1076, %v1049, 0.0
  %v1119 = vadd.f32 %v1117, %v1118
  %v1120 = vsel %vm1076, %v1052, 0.0
  %v1121 = vadd.f32 %v1119, %v1120
  %v1122 = vsel %vm1076, %v1054, 0.0
  %v1123 = vadd.f32 %v1121, %v1122
  %v1124 = vsel %vm1076, %v1057, 0.0
  %v1125 = vadd.f32 %v1123, %v1124
  %v1126 = vsel %vm1076, %v1059, 0.0
  %v1127 = vadd.f32 %v1125, %v1126
  %v1128 = vsel %vm1076, %v1062, 0.0
  %v1129 = vadd.f32 %v1127, %v1128
  %v1130 = vsel %vm1076, %v1064, 0.0
  %v1131 = vadd.f32 %v1129, %v1130
  %v1132 = vsel %vm1076, %v1067, 0.0
  %v1133 = vadd.f32 %v1131, %v1132
  %v1134 = vsel %vm1076, %v1069, 0.0
  %v1135 = vadd.f32 %v1133, %v1134
  %v1136 = vsel %vm1076, %v1072, 0.0
  %v1137 = vadd.f32 %v1135, %v1136
  %v1138 = vsel %vm1076, %v1074, 0.0
  %v1139 = vadd.f32 %v1137, %v1138
  %v1140 = vrot.slane %v1139, 4
  %v1141 = vadd.f32 %v1139, %v1140
  %v1142 = vrot.slane %v1141, 2
  %v1143 = vadd.f32 %v1141, %v1142
  %v1144 = vrot.slane %v1143, 1
  %v1145 = vadd.f32 %v1143, %v1144
  %v1146 = vrcp.pop 256.0
  %v1147 = vmul.f32 256.0, %v1146
  %v1148 = vsub.f32 1.0, %v1147
  %v1149 = vmul.f32 %v1146, %v1148
  %v1150 = vadd.f32 %v1146, %v1149
  %vm1151 = vweird.f32 %v1146
  %v1152 = vsel %vm1151, %v1146, %v1150
  %v1153 = vmul.f32 %v1145, %v1152
  %v1154 = vmul.f32 %v997, %v997
  %v1155 = vmul.f32 %v999, %v999
  %v1156 = vmul.f32 %v1002, %v1002
  %v1157 = vmul.f32 %v1004, %v1004
  %v1158 = vmul.f32 %v1007, %v1007
  %v1159 = vmul.f32 %v1009, %v1009
  %v1160 = vmul.f32 %v1012, %v1012
  %v1161 = vmul.f32 %v1014, %v1014
  %v1162 = vmul.f32 %v1017, %v1017
  %v1163 = vmul.f32 %v1019, %v1019
  %v1164 = vmul.f32 %v1022, %v1022
  %v1165 = vmul.f32 %v1024, %v1024
  %v1166 = vmul.f32 %v1027, %v1027
  %v1167 = vmul.f32 %v1029, %v1029
  %v1168 = vmul.f32 %v1032, %v1032
  %v1169 = vmul.f32 %v1034, %v1034
  %v1170 = vmul.f32 %v1037, %v1037
  %v1171 = vmul.f32 %v1039, %v1039
  %v1172 = vmul.f32 %v1042, %v1042
  %v1173 = vmul.f32 %v1044, %v1044
  %v1174 = vmul.f32 %v1047, %v1047
  %v1175 = vmul.f32 %v1049, %v1049
  %v1176 = vmul.f32 %v1052, %v1052
  %v1177 = vmul.f32 %v1054, %v1054
  %v1178 = vmul.f32 %v1057, %v1057
  %v1179 = vmul.f32 %v1059, %v1059
  %v1180 = vmul.f32 %v1062, %v1062
  %v1181 = vmul.f32 %v1064, %v1064
  %v1182 = vmul.f32 %v1067, %v1067
  %v1183 = vmul.f32 %v1069, %v1069
  %v1184 = vmul.f32 %v1072, %v1072
  %v1185 = vmul.f32 %v1074, %v1074
  %v1186 = vsel %vm1076, %v1154, 0.0
  %v1187 = vsel %vm1076, %v1155, 0.0
  %v1188 = vadd.f32 %v1186, %v1187
  %v1189 = vsel %vm1076, %v1156, 0.0
  %v1190 = vadd.f32 %v1188, %v1189
  %v1191 = vsel %vm1076, %v1157, 0.0
  %v1192 = vadd.f32 %v1190, %v1191
  %v1193 = vsel %vm1076, %v1158, 0.0
  %v1194 = vadd.f32 %v1192, %v1193
  %v1195 = vsel %vm1076, %v1159, 0.0
  %v1196 = vadd.f32 %v1194, %v1195
  %v1197 = vsel %vm1076, %v1160, 0.0
  %v1198 = vadd.f32 %v1196, %v1197
  %v1199 = vsel %vm1076, %v1161, 0.0
  %v1200 = vadd.f32 %v1198, %v1199
  %v1201 = vsel %vm1076, %v1162, 0.0
  %v1202 = vadd.f32 %v1200, %v1201
  %v1203 = vsel %vm1076, %v1163, 0.0
  %v1204 = vadd.f32 %v1202, %v1203
  %v1205 = vsel %vm1076, %v1164, 0.0
  %v1206 = vadd.f32 %v1204, %v1205
  %v1207 = vsel %vm1076, %v1165, 0.0
  %v1208 = vadd.f32 %v1206, %v1207
  %v1209 = vsel %vm1076, %v1166, 0.0
  %v1210 = vadd.f32 %v1208, %v1209
  %v1211 = vsel %vm1076, %v1167, 0.0
  %v1212 = vadd.f32 %v1210, %v1211
  %v1213 = vsel %vm1076, %v1168, 0.0
  %v1214 = vadd.f32 %v1212, %v1213
  %v1215 = vsel %vm1076, %v1169, 0.0
  %v1216 = vadd.f32 %v1214, %v1215
  %v1217 = vsel %vm1076, %v1170, 0.0
  %v1218 = vadd.f32 %v1216, %v1217
  %v1219 = vsel %vm1076, %v1171, 0.0
  %v1220 = vadd.f32 %v1218, %v1219
  %v1221 = vsel %vm1076, %v1172, 0.0
  %v1222 = vadd.f32 %v1220, %v1221
  %v1223 = vsel %vm1076, %v1173, 0.0
  %v1224 = vadd.f32 %v1222, %v1223
  %v1225 = vsel %vm1076, %v1174, 0.0
  %v1226 = vadd.f32 %v1224, %v1225
  %v1227 = vsel %vm1076, %v1175, 0.0
  %v1228 = vadd.f32 %v1226, %v1227
  %v1229 = vsel %vm1076, %v1176, 0.0
  %v1230 = vadd.f32 %v1228, %v1229
  %v1231 = vsel %vm1076, %v1177, 0.0
  %v1232 = vadd.f32 %v1230, %v1231
  %v1233 = vsel %vm1076, %v1178, 0.0
  %v1234 = vadd.f32 %v1232, %v1233
  %v1235 = vsel %vm1076, %v1179, 0.0
  %v1236 = vadd.f32 %v1234, %v1235
  %v1237 = vsel %vm1076, %v1180, 0.0
  %v1238 = vadd.f32 %v1236, %v1237
  %v1239 = vsel %vm1076, %v1181, 0.0
  %v1240 = vadd.f32 %v1238, %v1239
  %v1241 = vsel %vm1076, %v1182, 0.0
  %v1242 = vadd.f32 %v1240, %v1241
  %v1243 = vsel %vm1076, %v1183, 0.0
  %v1244 = vadd.f32 %v1242, %v1243
  %v1245 = vsel %vm1076, %v1184, 0.0
  %v1246 = vadd.f32 %v1244, %v1245
  %v1247 = vsel %vm1076, %v1185, 0.0
  %v1248 = vadd.f32 %v1246, %v1247
  %v1249 = vrot.slane %v1248, 4
  %v1250 = vadd.f32 %v1248, %v1249
  %v1251 = vrot.slane %v1250, 2
  %v1252 = vadd.f32 %v1250, %v1251
  %v1253 = vrot.slane %v1252, 1
  %v1254 = vadd.f32 %v1252, %v1253
  %v1255 = vmul.f32 %v1254, %v1152
  %v1256 = vmul.f32 %v1153, %v1153
  %v1257 = vsub.f32 %v1255, %v1256
  %v1258 = vmax.f32 %v1257, 0.0
  %v1259 = vsub.f32 %v997, %v1153
  %v1260 = vsub.f32 %v999, %v1153
  %v1261 = vsub.f32 %v1002, %v1153
  %v1262 = vsub.f32 %v1004, %v1153
  %v1263 = vsub.f32 %v1007, %v1153
  %v1264 = vsub.f32 %v1009, %v1153
  %v1265 = vsub.f32 %v1012, %v1153
  %v1266 = vsub.f32 %v1014, %v1153
  %v1267 = vsub.f32 %v1017, %v1153
  %v1268 = vsub.f32 %v1019, %v1153
  %v1269 = vsub.f32 %v1022, %v1153
  %v1270 = vsub.f32 %v1024, %v1153
  %v1271 = vsub.f32 %v1027, %v1153
  %v1272 = vsub.f32 %v1029, %v1153
  %v1273 = vsub.f32 %v1032, %v1153
  %v1274 = vsub.f32 %v1034, %v1153
  %v1275 = vsub.f32 %v1037, %v1153
  %v1276 = vsub.f32 %v1039, %v1153
  %v1277 = vsub.f32 %v1042, %v1153
  %v1278 = vsub.f32 %v1044, %v1153
  %v1279 = vsub.f32 %v1047, %v1153
  %v1280 = vsub.f32 %v1049, %v1153
  %v1281 = vsub.f32 %v1052, %v1153
  %v1282 = vsub.f32 %v1054, %v1153
  %v1283 = vsub.f32 %v1057, %v1153
  %v1284 = vsub.f32 %v1059, %v1153
  %v1285 = vsub.f32 %v1062, %v1153
  %v1286 = vsub.f32 %v1064, %v1153
  %v1287 = vsub.f32 %v1067, %v1153
  %v1288 = vsub.f32 %v1069, %v1153
  %v1289 = vsub.f32 %v1072, %v1153
  %v1290 = vsub.f32 %v1074, %v1153
  %v1291 = vadd.f32 %v1258, 1e-05
  %v1292 = vrsqrt.pop %v1291
  %v1293 = vmul.f32 %v1292, %v1291
  %v1294 = vmul.f32 %v1293, %v1292
  %v1295 = vmul.f32 0.5, %v1294
  %v1296 = vsub.f32 1.5, %v1295
  %v1297 = vmul.f32 %v1292, %v1296
  %vm1298 = vweird.f32 %v1291
  %vm1299 = vweird.f32 %v1292
  %vm1300 = vmor %vm1298, %vm1299
  %v1301 = vsel %vm1300, %v1292, %v1297
  %v1302 = vmul.f32 %v1259, %v1301
  %v1303 = vmul.f32 %v1260, %v1301
  %v1304 = vmul.f32 %v1261, %v1301
  %v1305 = vmul.f32 %v1262, %v1301
  %v1306 = vmul.f32 %v1263, %v1301
  %v1307 = vmul.f32 %v1264, %v1301
  %v1308 = vmul.f32 %v1265, %v1301
  %v1309 = vmul.f32 %v1266, %v1301
  %v1310 = vmul.f32 %v1267, %v1301
  %v1311 = vmul.f32 %v1268, %v1301
  %v1312 = vmul.f32 %v1269, %v1301
  %v1313 = vmul.f32 %v1270, %v1301
  %v1314 = vmul.f32 %v1271, %v1301
  %v1315 = vmul.f32 %v1272, %v1301
  %v1316 = vmul.f32 %v1273, %v1301
  %v1317 = vmul.f32 %v1274, %v1301
  %v1318 = vmul.f32 %v1275, %v1301
  %v1319 = vmul.f32 %v1276, %v1301
  %v1320 = vmul.f32 %v1277, %v1301
  %v1321 = vmul.f32 %v1278, %v1301
  %v1322 = vmul.f32 %v1279, %v1301
  %v1323 = vmul.f32 %v1280, %v1301
  %v1324 = vmul.f32 %v1281, %v1301
  %v1325 = vmul.f32 %v1282, %v1301
  %v1326 = vmul.f32 %v1283, %v1301
  %v1327 = vmul.f32 %v1284, %v1301
  %v1328 = vmul.f32 %v1285, %v1301
  %v1329 = vmul.f32 %v1286, %v1301
  %v1330 = vmul.f32 %v1287, %v1301
  %v1331 = vmul.f32 %v1288, %v1301
  %v1332 = vmul.f32 %v1289, %v1301
  %v1333 = vmul.f32 %v1290, %v1301
  %v1335 = vperm.slane %v91, 0
  %v1337 = vmul.f32 %v1302, %v1335
  %v1338 = vmul.f32 %v1303, %v1335
  %v1339 = vmul.f32 %v1304, %v1335
  %v1340 = vmul.f32 %v1305, %v1335
  %v1341 = vmul.f32 %v1306, %v1335
  %v1342 = vmul.f32 %v1307, %v1335
  %v1343 = vmul.f32 %v1308, %v1335
  %v1344 = vmul.f32 %v1309, %v1335
  %v1345 = vmul.f32 %v1310, %v1335
  %v1346 = vmul.f32 %v1311, %v1335
  %v1347 = vmul.f32 %v1312, %v1335
  %v1348 = vmul.f32 %v1313, %v1335
  %v1349 = vmul.f32 %v1314, %v1335
  %v1350 = vmul.f32 %v1315, %v1335
  %v1351 = vmul.f32 %v1316, %v1335
  %v1352 = vmul.f32 %v1317, %v1335
  %v1353 = vmul.f32 %v1318, %v1335
  %v1354 = vmul.f32 %v1319, %v1335
  %v1355 = vmul.f32 %v1320, %v1335
  %v1356 = vmul.f32 %v1321, %v1335
  %v1357 = vmul.f32 %v1322, %v1335
  %v1358 = vmul.f32 %v1323, %v1335
  %v1359 = vmul.f32 %v1324, %v1335
  %v1360 = vmul.f32 %v1325, %v1335
  %v1361 = vmul.f32 %v1326, %v1335
  %v1362 = vmul.f32 %v1327, %v1335
  %v1363 = vmul.f32 %v1328, %v1335
  %v1364 = vmul.f32 %v1329, %v1335
  %v1365 = vmul.f32 %v1330, %v1335
  %v1366 = vmul.f32 %v1331, %v1335
  %v1367 = vmul.f32 %v1332, %v1335
  %v1368 = vmul.f32 %v1333, %v1335
  %v1370 = vperm.slane %v92, 0
  %v1372 = vadd.f32 %v1337, %v1370
  %v1373 = vadd.f32 %v1338, %v1370
  %v1374 = vadd.f32 %v1339, %v1370
  %v1375 = vadd.f32 %v1340, %v1370
  %v1376 = vadd.f32 %v1341, %v1370
  %v1377 = vadd.f32 %v1342, %v1370
  %v1378 = vadd.f32 %v1343, %v1370
  %v1379 = vadd.f32 %v1344, %v1370
  %v1380 = vadd.f32 %v1345, %v1370
  %v1381 = vadd.f32 %v1346, %v1370
  %v1382 = vadd.f32 %v1347, %v1370
  %v1383 = vadd.f32 %v1348, %v1370
  %v1384 = vadd.f32 %v1349, %v1370
  %v1385 = vadd.f32 %v1350, %v1370
  %v1386 = vadd.f32 %v1351, %v1370
  %v1387 = vadd.f32 %v1352, %v1370
  %v1388 = vadd.f32 %v1353, %v1370
  %v1389 = vadd.f32 %v1354, %v1370
  %v1390 = vadd.f32 %v1355, %v1370
  %v1391 = vadd.f32 %v1356, %v1370
  %v1392 = vadd.f32 %v1357, %v1370
  %v1393 = vadd.f32 %v1358, %v1370
  %v1394 = vadd.f32 %v1359, %v1370
  %v1395 = vadd.f32 %v1360, %v1370
  %v1396 = vadd.f32 %v1361, %v1370
  %v1397 = vadd.f32 %v1362, %v1370
  %v1398 = vadd.f32 %v1363, %v1370
  %v1399 = vadd.f32 %v1364, %v1370
  %v1400 = vadd.f32 %v1365, %v1370
  %v1401 = vadd.f32 %v1366, %v1370
  %v1402 = vadd.f32 %v1367, %v1370
  %v1403 = vadd.f32 %v1368, %v1370
  %vm1404 = vcmp.ge.f32.partialorder %v1372, 0.0
  %vm1405 = vcmp.ge.f32.partialorder %v1373, 0.0
  %vm1406 = vcmp.ge.f32.partialorder %v1374, 0.0
  %vm1407 = vcmp.ge.f32.partialorder %v1375, 0.0
  %vm1408 = vcmp.ge.f32.partialorder %v1376, 0.0
  %vm1409 = vcmp.ge.f32.partialorder %v1377, 0.0
  %vm1410 = vcmp.ge.f32.partialorder %v1378, 0.0
  %vm1411 = vcmp.ge.f32.partialorder %v1379, 0.0
  %vm1412 = vcmp.ge.f32.partialorder %v1380, 0.0
  %vm1413 = vcmp.ge.f32.partialorder %v1381, 0.0
  %vm1414 = vcmp.ge.f32.partialorder %v1382, 0.0
  %vm1415 = vcmp.ge.f32.partialorder %v1383, 0.0
  %vm1416 = vcmp.ge.f32.partialorder %v1384, 0.0
  %vm1417 = vcmp.ge.f32.partialorder %v1385, 0.0
  %vm1418 = vcmp.ge.f32.partialorder %v1386, 0.0
  %vm1419 = vcmp.ge.f32.partialorder %v1387, 0.0
  %vm1420 = vcmp.ge.f32.partialorder %v1388, 0.0
  %vm1421 = vcmp.ge.f32.partialorder %v1389, 0.0
  %vm1422 = vcmp.ge.f32.partialorder %v1390, 0.0
  %vm1423 = vcmp.ge.f32.partialorder %v1391, 0.0
  %vm1424 = vcmp.ge.f32.partialorder %v1392, 0.0
  %vm1425 = vcmp.ge.f32.partialorder %v1393, 0.0
  %vm1426 = vcmp.ge.f32.partialorder %v1394, 0.0
  %vm1427 = vcmp.ge.f32.partialorder %v1395, 0.0
  %vm1428 = vcmp.ge.f32.partialorder %v1396, 0.0
  %vm1429 = vcmp.ge.f32.partialorder %v1397, 0.0
  %vm1430 = vcmp.ge.f32.partialorder %v1398, 0.0
  %vm1431 = vcmp.ge.f32.partialorder %v1399, 0.0
  %vm1432 = vcmp.ge.f32.partialorder %v1400, 0.0
  %vm1433 = vcmp.ge.f32.partialorder %v1401, 0.0
  %vm1434 = vcmp.ge.f32.partialorder %v1402, 0.0
  %vm1435 = vcmp.ge.f32.partialorder %v1403, 0.0
  %v1436 = vmul.f32 %v1372, 0.2
  %v1437 = vmul.f32 %v1373, 0.2
  %v1438 = vmul.f32 %v1374, 0.2
  %v1439 = vmul.f32 %v1375, 0.2
  %v1440 = vmul.f32 %v1376, 0.2
  %v1441 = vmul.f32 %v1377, 0.2
  %v1442 = vmul.f32 %v1378, 0.2
  %v1443 = vmul.f32 %v1379, 0.2
  %v1444 = vmul.f32 %v1380, 0.2
  %v1445 = vmul.f32 %v1381, 0.2
  %v1446 = vmul.f32 %v1382, 0.2
  %v1447 = vmul.f32 %v1383, 0.2
  %v1448 = vmul.f32 %v1384, 0.2
  %v1449 = vmul.f32 %v1385, 0.2
  %v1450 = vmul.f32 %v1386, 0.2
  %v1451 = vmul.f32 %v1387, 0.2
  %v1452 = vmul.f32 %v1388, 0.2
  %v1453 = vmul.f32 %v1389, 0.2
  %v1454 = vmul.f32 %v1390, 0.2
  %v1455 = vmul.f32 %v1391, 0.2
  %v1456 = vmul.f32 %v1392, 0.2
  %v1457 = vmul.f32 %v1393, 0.2
  %v1458 = vmul.f32 %v1394, 0.2
  %v1459 = vmul.f32 %v1395, 0.2
  %v1460 = vmul.f32 %v1396, 0.2
  %v1461 = vmul.f32 %v1397, 0.2
  %v1462 = vmul.f32 %v1398, 0.2
  %v1463 = vmul.f32 %v1399, 0.2
  %v1464 = vmul.f32 %v1400, 0.2
  %v1465 = vmul.f32 %v1401, 0.2
  %v1466 = vmul.f32 %v1402, 0.2
  %v1467 = vmul.f32 %v1403, 0.2
  %v1468 = vsel %vm1404, %v1372, %v1436
  %v1469 = vsel %vm1405, %v1373, %v1437
  %v1470 = vsel %vm1406, %v1374, %v1438
  %v1471 = vsel %vm1407, %v1375, %v1439
  %v1472 = vsel %vm1408, %v1376, %v1440
  %v1473 = vsel %vm1409, %v1377, %v1441
  %v1474 = vsel %vm1410, %v1378, %v1442
  %v1475 = vsel %vm1411, %v1379, %v1443
  %v1476 = vsel %vm1412, %v1380, %v1444
  %v1477 = vsel %vm1413, %v1381, %v1445
  %v1478 = vsel %vm1414, %v1382, %v1446
  %v1479 = vsel %vm1415, %v1383, %v1447
  %v1480 = vsel %vm1416, %v1384, %v1448
  %v1481 = vsel %vm1417, %v1385, %v1449
  %v1482 = vsel %vm1418, %v1386, %v1450
  %v1483 = vsel %vm1419, %v1387, %v1451
  %v1484 = vsel %vm1420, %v1388, %v1452
  %v1485 = vsel %vm1421, %v1389, %v1453
  %v1486 = vsel %vm1422, %v1390, %v1454
  %v1487 = vsel %vm1423, %v1391, %v1455
  %v1488 = vsel %vm1424, %v1392, %v1456
  %v1489 = vsel %vm1425, %v1393, %v1457
  %v1490 = vsel %vm1426, %v1394, %v1458
  %v1491 = vsel %vm1427, %v1395, %v1459
  %v1492 = vsel %vm1428, %v1396, %v1460
  %v1493 = vsel %vm1429, %v1397, %v1461
  %v1494 = vsel %vm1430, %v1398, %v1462
  %v1495 = vsel %vm1431, %v1399, %v1463
  %v1496 = vsel %vm1432, %v1400, %v1464
  %v1497 = vsel %vm1433, %v1401, %v1465
  %v1498 = vsel %vm1434, %v1402, %v1466
  %v1499 = vsel %vm1435, %v1403, %v1467
  %v1500 = vpack.c.bf16 %v1469, %v1468
  %v1501 = vpack.c.bf16 %v1471, %v1470
  %v1502 = vpack.c.bf16 %v1473, %v1472
  %v1503 = vpack.c.bf16 %v1475, %v1474
  %v1504 = vpack.c.bf16 %v1477, %v1476
  %v1505 = vpack.c.bf16 %v1479, %v1478
  %v1506 = vpack.c.bf16 %v1481, %v1480
  %v1507 = vpack.c.bf16 %v1483, %v1482
  %v1508 = vpack.c.bf16 %v1485, %v1484
  %v1509 = vpack.c.bf16 %v1487, %v1486
  %v1510 = vpack.c.bf16 %v1489, %v1488
  %v1511 = vpack.c.bf16 %v1491, %v1490
  %v1512 = vpack.c.bf16 %v1493, %v1492
  %v1513 = vpack.c.bf16 %v1495, %v1494
  %v1514 = vpack.c.bf16 %v1497, %v1496
  %v1515 = vpack.c.bf16 %v1499, %v1498
  %v1516 = vld [vmem:[%s5] sm:$0xf]
  %v1517 = vld [vmem:[%s5 + $0x4] sm:$0xf]
  %v1518 = vld [vmem:[%s5 + $0x8] sm:$0xf]
  %v1519 = vld [vmem:[%s5 + $0xc] sm:$0xf]
  %v1520 = vld [vmem:[%s5 + $0x10] sm:$0xf]
  %v1521 = vld [vmem:[%s5 + $0x14] sm:$0xf]
  %v1522 = vld [vmem:[%s5 + $0x18] sm:$0xf]
  %v1523 = vld [vmem:[%s5 + $0x1c] sm:$0xf]
  %v1532 = vunpack.c.l.b16 %v1516
  %v1533 = vunpack.c.l.b16 %v1517
  %v1534 = vunpack.c.l.b16 %v1518
  %v1535 = vunpack.c.l.b16 %v1519
  %v1536 = vunpack.c.l.b16 %v1520
  %v1537 = vunpack.c.l.b16 %v1521
  %v1538 = vunpack.c.l.b16 %v1522
  %v1539 = vunpack.c.l.b16 %v1523
  %v1540 = vpack.c.b16 %v1533, %v1532
  %v1541 = vpack.c.b16 %v1535, %v1534
  %v1542 = vpack.c.b16 %v1537, %v1536
  %v1543 = vpack.c.b16 %v1539, %v1538
  %v1549 = vsel %vm1076, %v1500, 0
  %v1552 = vsel %vm1076, %v1501, 0
  %v1555 = vsel %vm1076, %v1502, 0
  %v1558 = vsel %vm1076, %v1503, 0
  %v1561 = vsel %vm1076, %v1504, 0
  %v1564 = vsel %vm1076, %v1505, 0
  %v1567 = vsel %vm1076, %v1506, 0
  %v1570 = vsel %vm1076, %v1507, 0
  %v1573 = vsel %vm1076, %v1508, 0
  %v1576 = vsel %vm1076, %v1509, 0
  %v1579 = vsel %vm1076, %v1510, 0
  %v1582 = vsel %vm1076, %v1511, 0
  %v1585 = vsel %vm1076, %v1512, 0
  %v1588 = vsel %vm1076, %v1513, 0
  %v1591 = vsel %vm1076, %v1514, 0
  %v1594 = vsel %vm1076, %v1515, 0
  %1596 = vmatpush.bf16.msra.mxu0 0
  %1597 = vmatpush.bf16.msra.mxu0 0
  %1598 = vmatpush.bf16.msra.mxu0 0
  %1599 = vmatpush.bf16.msra.mxu0 0
  %1600 = vmatpush.bf16.msra.mxu0 %v1543
  %1601 = vmatpush.bf16.msra.mxu0 %v1542
  %1602 = vmatpush.bf16.msra.mxu0 %v1541
  %1603 = vmatpush.bf16.msra.mxu0 %v1540
  %1604 = vmatmul.bf16.gmra.mxu0 %v1549
  %v1605 = vpop.f32.mrf.mxu0
  %v1606 = vadd.f32 0.0, %v1605
  %v1607 = vpop.f32.mrf.mxu0
  %v1608 = vadd.f32 0.0, %v1607
  %1609 = vmatmul.bf16.gmra.mxu0 %v1552
  %v1610 = vpop.f32.mrf.mxu0
  %v1611 = vadd.f32 0.0, %v1610
  %v1612 = vpop.f32.mrf.mxu0
  %v1613 = vadd.f32 0.0, %v1612
  %1614 = vmatmul.bf16.gmra.mxu0 %v1555
  %v1615 = vpop.f32.mrf.mxu0
  %v1616 = vadd.f32 0.0, %v1615
  %v1617 = vpop.f32.mrf.mxu0
  %v1618 = vadd.f32 0.0, %v1617
  %1619 = vmatmul.bf16.gmra.mxu0 %v1558
  %v1620 = vpop.f32.mrf.mxu0
  %v1621 = vadd.f32 0.0, %v1620
  %v1622 = vpop.f32.mrf.mxu0
  %v1623 = vadd.f32 0.0, %v1622
  %1624 = vmatmul.bf16.gmra.mxu0 %v1561
  %v1625 = vpop.f32.mrf.mxu0
  %v1626 = vadd.f32 0.0, %v1625
  %v1627 = vpop.f32.mrf.mxu0
  %v1628 = vadd.f32 0.0, %v1627
  %1629 = vmatmul.bf16.gmra.mxu0 %v1564
  %v1630 = vpop.f32.mrf.mxu0
  %v1631 = vadd.f32 0.0, %v1630
  %v1632 = vpop.f32.mrf.mxu0
  %v1633 = vadd.f32 0.0, %v1632
  %1634 = vmatmul.bf16.gmra.mxu0 %v1567
  %v1635 = vpop.f32.mrf.mxu0
  %v1636 = vadd.f32 0.0, %v1635
  %v1637 = vpop.f32.mrf.mxu0
  %v1638 = vadd.f32 0.0, %v1637
  %1639 = vmatmul.bf16.gmra.mxu0 %v1570
  %v1640 = vpop.f32.mrf.mxu0
  %v1641 = vadd.f32 0.0, %v1640
  %v1642 = vpop.f32.mrf.mxu0
  %v1643 = vadd.f32 0.0, %v1642
  %1644 = vmatmul.bf16.gmra.mxu0 %v1573
  %v1645 = vpop.f32.mrf.mxu0
  %v1646 = vadd.f32 0.0, %v1645
  %v1647 = vpop.f32.mrf.mxu0
  %v1648 = vadd.f32 0.0, %v1647
  %1649 = vmatmul.bf16.gmra.mxu0 %v1576
  %v1650 = vpop.f32.mrf.mxu0
  %v1651 = vadd.f32 0.0, %v1650
  %v1652 = vpop.f32.mrf.mxu0
  %v1653 = vadd.f32 0.0, %v1652
  %1654 = vmatmul.bf16.gmra.mxu0 %v1579
  %v1655 = vpop.f32.mrf.mxu0
  %v1656 = vadd.f32 0.0, %v1655
  %v1657 = vpop.f32.mrf.mxu0
  %v1658 = vadd.f32 0.0, %v1657
  %1659 = vmatmul.bf16.gmra.mxu0 %v1582
  %v1660 = vpop.f32.mrf.mxu0
  %v1661 = vadd.f32 0.0, %v1660
  %v1662 = vpop.f32.mrf.mxu0
  %v1663 = vadd.f32 0.0, %v1662
  %1664 = vmatmul.bf16.gmra.mxu0 %v1585
  %v1665 = vpop.f32.mrf.mxu0
  %v1666 = vadd.f32 0.0, %v1665
  %v1667 = vpop.f32.mrf.mxu0
  %v1668 = vadd.f32 0.0, %v1667
  %1669 = vmatmul.bf16.gmra.mxu0 %v1588
  %v1670 = vpop.f32.mrf.mxu0
  %v1671 = vadd.f32 0.0, %v1670
  %v1672 = vpop.f32.mrf.mxu0
  %v1673 = vadd.f32 0.0, %v1672
  %1674 = vmatmul.bf16.gmra.mxu0 %v1591
  %v1675 = vpop.f32.mrf.mxu0
  %v1676 = vadd.f32 0.0, %v1675
  %v1677 = vpop.f32.mrf.mxu0
  %v1678 = vadd.f32 0.0, %v1677
  %1679 = vmatmul.bf16.gmra.mxu0 %v1594
  %v1680 = vpop.f32.mrf.mxu0
  %v1681 = vadd.f32 0.0, %v1680
  %v1682 = vpop.f32.mrf.mxu0
  %v1683 = vadd.f32 0.0, %v1682
  %1684 = vdwg.mxu0
  %vm1685 = vcmask 261120
  %v1686 = vsel %vm1685, %v1606, 0.0
  %v1687 = vsel %vm1685, %v1608, 0.0
  %v1688 = vadd.f32 %v1686, %v1687
  %v1689 = vsel %vm1685, %v1611, 0.0
  %v1690 = vadd.f32 %v1688, %v1689
  %v1691 = vsel %vm1685, %v1613, 0.0
  %v1692 = vadd.f32 %v1690, %v1691
  %v1693 = vsel %vm1685, %v1616, 0.0
  %v1694 = vadd.f32 %v1692, %v1693
  %v1695 = vsel %vm1685, %v1618, 0.0
  %v1696 = vadd.f32 %v1694, %v1695
  %v1697 = vsel %vm1685, %v1621, 0.0
  %v1698 = vadd.f32 %v1696, %v1697
  %v1699 = vsel %vm1685, %v1623, 0.0
  %v1700 = vadd.f32 %v1698, %v1699
  %v1701 = vsel %vm1685, %v1626, 0.0
  %v1702 = vadd.f32 %v1700, %v1701
  %v1703 = vsel %vm1685, %v1628, 0.0
  %v1704 = vadd.f32 %v1702, %v1703
  %v1705 = vsel %vm1685, %v1631, 0.0
  %v1706 = vadd.f32 %v1704, %v1705
  %v1707 = vsel %vm1685, %v1633, 0.0
  %v1708 = vadd.f32 %v1706, %v1707
  %v1709 = vsel %vm1685, %v1636, 0.0
  %v1710 = vadd.f32 %v1708, %v1709
  %v1711 = vsel %vm1685, %v1638, 0.0
  %v1712 = vadd.f32 %v1710, %v1711
  %v1713 = vsel %vm1685, %v1641, 0.0
  %v1714 = vadd.f32 %v1712, %v1713
  %v1715 = vsel %vm1685, %v1643, 0.0
  %v1716 = vadd.f32 %v1714, %v1715
  %v1717 = vsel %vm1685, %v1646, 0.0
  %v1718 = vadd.f32 %v1716, %v1717
  %v1719 = vsel %vm1685, %v1648, 0.0
  %v1720 = vadd.f32 %v1718, %v1719
  %v1721 = vsel %vm1685, %v1651, 0.0
  %v1722 = vadd.f32 %v1720, %v1721
  %v1723 = vsel %vm1685, %v1653, 0.0
  %v1724 = vadd.f32 %v1722, %v1723
  %v1725 = vsel %vm1685, %v1656, 0.0
  %v1726 = vadd.f32 %v1724, %v1725
  %v1727 = vsel %vm1685, %v1658, 0.0
  %v1728 = vadd.f32 %v1726, %v1727
  %v1729 = vsel %vm1685, %v1661, 0.0
  %v1730 = vadd.f32 %v1728, %v1729
  %v1731 = vsel %vm1685, %v1663, 0.0
  %v1732 = vadd.f32 %v1730, %v1731
  %v1733 = vsel %vm1685, %v1666, 0.0
  %v1734 = vadd.f32 %v1732, %v1733
  %v1735 = vsel %vm1685, %v1668, 0.0
  %v1736 = vadd.f32 %v1734, %v1735
  %v1737 = vsel %vm1685, %v1671, 0.0
  %v1738 = vadd.f32 %v1736, %v1737
  %v1739 = vsel %vm1685, %v1673, 0.0
  %v1740 = vadd.f32 %v1738, %v1739
  %v1741 = vsel %vm1685, %v1676, 0.0
  %v1742 = vadd.f32 %v1740, %v1741
  %v1743 = vsel %vm1685, %v1678, 0.0
  %v1744 = vadd.f32 %v1742, %v1743
  %v1745 = vsel %vm1685, %v1681, 0.0
  %v1746 = vadd.f32 %v1744, %v1745
  %v1747 = vsel %vm1685, %v1683, 0.0
  %v1748 = vadd.f32 %v1746, %v1747
  %v1749 = vrot.slane %v1748, 4
  %v1750 = vadd.f32 %v1748, %v1749
  %v1751 = vrot.slane %v1750, 2
  %v1752 = vadd.f32 %v1750, %v1751
  %v1753 = vrot.slane %v1752, 1
  %v1754 = vadd.f32 %v1752, %v1753
  %v1755 = vmul.f32 %v1754, %v1152
  %v1756 = vmul.f32 %v1606, %v1606
  %v1757 = vmul.f32 %v1608, %v1608
  %v1758 = vmul.f32 %v1611, %v1611
  %v1759 = vmul.f32 %v1613, %v1613
  %v1760 = vmul.f32 %v1616, %v1616
  %v1761 = vmul.f32 %v1618, %v1618
  %v1762 = vmul.f32 %v1621, %v1621
  %v1763 = vmul.f32 %v1623, %v1623
  %v1764 = vmul.f32 %v1626, %v1626
  %v1765 = vmul.f32 %v1628, %v1628
  %v1766 = vmul.f32 %v1631, %v1631
  %v1767 = vmul.f32 %v1633, %v1633
  %v1768 = vmul.f32 %v1636, %v1636
  %v1769 = vmul.f32 %v1638, %v1638
  %v1770 = vmul.f32 %v1641, %v1641
  %v1771 = vmul.f32 %v1643, %v1643
  %v1772 = vmul.f32 %v1646, %v1646
  %v1773 = vmul.f32 %v1648, %v1648
  %v1774 = vmul.f32 %v1651, %v1651
  %v1775 = vmul.f32 %v1653, %v1653
  %v1776 = vmul.f32 %v1656, %v1656
  %v1777 = vmul.f32 %v1658, %v1658
  %v1778 = vmul.f32 %v1661, %v1661
  %v1779 = vmul.f32 %v1663, %v1663
  %v1780 = vmul.f32 %v1666, %v1666
  %v1781 = vmul.f32 %v1668, %v1668
  %v1782 = vmul.f32 %v1671, %v1671
  %v1783 = vmul.f32 %v1673, %v1673
  %v1784 = vmul.f32 %v1676, %v1676
  %v1785 = vmul.f32 %v1678, %v1678
  %v1786 = vmul.f32 %v1681, %v1681
  %v1787 = vmul.f32 %v1683, %v1683
  %v1788 = vsel %vm1685, %v1756, 0.0
  %v1789 = vsel %vm1685, %v1757, 0.0
  %v1790 = vadd.f32 %v1788, %v1789
  %v1791 = vsel %vm1685, %v1758, 0.0
  %v1792 = vadd.f32 %v1790, %v1791
  %v1793 = vsel %vm1685, %v1759, 0.0
  %v1794 = vadd.f32 %v1792, %v1793
  %v1795 = vsel %vm1685, %v1760, 0.0
  %v1796 = vadd.f32 %v1794, %v1795
  %v1797 = vsel %vm1685, %v1761, 0.0
  %v1798 = vadd.f32 %v1796, %v1797
  %v1799 = vsel %vm1685, %v1762, 0.0
  %v1800 = vadd.f32 %v1798, %v1799
  %v1801 = vsel %vm1685, %v1763, 0.0
  %v1802 = vadd.f32 %v1800, %v1801
  %v1803 = vsel %vm1685, %v1764, 0.0
  %v1804 = vadd.f32 %v1802, %v1803
  %v1805 = vsel %vm1685, %v1765, 0.0
  %v1806 = vadd.f32 %v1804, %v1805
  %v1807 = vsel %vm1685, %v1766, 0.0
  %v1808 = vadd.f32 %v1806, %v1807
  %v1809 = vsel %vm1685, %v1767, 0.0
  %v1810 = vadd.f32 %v1808, %v1809
  %v1811 = vsel %vm1685, %v1768, 0.0
  %v1812 = vadd.f32 %v1810, %v1811
  %v1813 = vsel %vm1685, %v1769, 0.0
  %v1814 = vadd.f32 %v1812, %v1813
  %v1815 = vsel %vm1685, %v1770, 0.0
  %v1816 = vadd.f32 %v1814, %v1815
  %v1817 = vsel %vm1685, %v1771, 0.0
  %v1818 = vadd.f32 %v1816, %v1817
  %v1819 = vsel %vm1685, %v1772, 0.0
  %v1820 = vadd.f32 %v1818, %v1819
  %v1821 = vsel %vm1685, %v1773, 0.0
  %v1822 = vadd.f32 %v1820, %v1821
  %v1823 = vsel %vm1685, %v1774, 0.0
  %v1824 = vadd.f32 %v1822, %v1823
  %v1825 = vsel %vm1685, %v1775, 0.0
  %v1826 = vadd.f32 %v1824, %v1825
  %v1827 = vsel %vm1685, %v1776, 0.0
  %v1828 = vadd.f32 %v1826, %v1827
  %v1829 = vsel %vm1685, %v1777, 0.0
  %v1830 = vadd.f32 %v1828, %v1829
  %v1831 = vsel %vm1685, %v1778, 0.0
  %v1832 = vadd.f32 %v1830, %v1831
  %v1833 = vsel %vm1685, %v1779, 0.0
  %v1834 = vadd.f32 %v1832, %v1833
  %v1835 = vsel %vm1685, %v1780, 0.0
  %v1836 = vadd.f32 %v1834, %v1835
  %v1837 = vsel %vm1685, %v1781, 0.0
  %v1838 = vadd.f32 %v1836, %v1837
  %v1839 = vsel %vm1685, %v1782, 0.0
  %v1840 = vadd.f32 %v1838, %v1839
  %v1841 = vsel %vm1685, %v1783, 0.0
  %v1842 = vadd.f32 %v1840, %v1841
  %v1843 = vsel %vm1685, %v1784, 0.0
  %v1844 = vadd.f32 %v1842, %v1843
  %v1845 = vsel %vm1685, %v1785, 0.0
  %v1846 = vadd.f32 %v1844, %v1845
  %v1847 = vsel %vm1685, %v1786, 0.0
  %v1848 = vadd.f32 %v1846, %v1847
  %v1849 = vsel %vm1685, %v1787, 0.0
  %v1850 = vadd.f32 %v1848, %v1849
  %v1851 = vrot.slane %v1850, 4
  %v1852 = vadd.f32 %v1850, %v1851
  %v1853 = vrot.slane %v1852, 2
  %v1854 = vadd.f32 %v1852, %v1853
  %v1855 = vrot.slane %v1854, 1
  %v1856 = vadd.f32 %v1854, %v1855
  %v1857 = vmul.f32 %v1856, %v1152
  %v1858 = vmul.f32 %v1755, %v1755
  %v1859 = vsub.f32 %v1857, %v1858
  %v1860 = vmax.f32 %v1859, 0.0
  %v1861 = vsub.f32 %v1606, %v1755
  %v1862 = vsub.f32 %v1608, %v1755
  %v1863 = vsub.f32 %v1611, %v1755
  %v1864 = vsub.f32 %v1613, %v1755
  %v1865 = vsub.f32 %v1616, %v1755
  %v1866 = vsub.f32 %v1618, %v1755
  %v1867 = vsub.f32 %v1621, %v1755
  %v1868 = vsub.f32 %v1623, %v1755
  %v1869 = vsub.f32 %v1626, %v1755
  %v1870 = vsub.f32 %v1628, %v1755
  %v1871 = vsub.f32 %v1631, %v1755
  %v1872 = vsub.f32 %v1633, %v1755
  %v1873 = vsub.f32 %v1636, %v1755
  %v1874 = vsub.f32 %v1638, %v1755
  %v1875 = vsub.f32 %v1641, %v1755
  %v1876 = vsub.f32 %v1643, %v1755
  %v1877 = vsub.f32 %v1646, %v1755
  %v1878 = vsub.f32 %v1648, %v1755
  %v1879 = vsub.f32 %v1651, %v1755
  %v1880 = vsub.f32 %v1653, %v1755
  %v1881 = vsub.f32 %v1656, %v1755
  %v1882 = vsub.f32 %v1658, %v1755
  %v1883 = vsub.f32 %v1661, %v1755
  %v1884 = vsub.f32 %v1663, %v1755
  %v1885 = vsub.f32 %v1666, %v1755
  %v1886 = vsub.f32 %v1668, %v1755
  %v1887 = vsub.f32 %v1671, %v1755
  %v1888 = vsub.f32 %v1673, %v1755
  %v1889 = vsub.f32 %v1676, %v1755
  %v1890 = vsub.f32 %v1678, %v1755
  %v1891 = vsub.f32 %v1681, %v1755
  %v1892 = vsub.f32 %v1683, %v1755
  %v1893 = vadd.f32 %v1860, 1e-05
  %v1894 = vrsqrt.pop %v1893
  %v1895 = vmul.f32 %v1894, %v1893
  %v1896 = vmul.f32 %v1895, %v1894
  %v1897 = vmul.f32 0.5, %v1896
  %v1898 = vsub.f32 1.5, %v1897
  %v1899 = vmul.f32 %v1894, %v1898
  %vm1900 = vweird.f32 %v1893
  %vm1901 = vweird.f32 %v1894
  %vm1902 = vmor %vm1900, %vm1901
  %v1903 = vsel %vm1902, %v1894, %v1899
  %v1904 = vmul.f32 %v1861, %v1903
  %v1905 = vmul.f32 %v1862, %v1903
  %v1906 = vmul.f32 %v1863, %v1903
  %v1907 = vmul.f32 %v1864, %v1903
  %v1908 = vmul.f32 %v1865, %v1903
  %v1909 = vmul.f32 %v1866, %v1903
  %v1910 = vmul.f32 %v1867, %v1903
  %v1911 = vmul.f32 %v1868, %v1903
  %v1912 = vmul.f32 %v1869, %v1903
  %v1913 = vmul.f32 %v1870, %v1903
  %v1914 = vmul.f32 %v1871, %v1903
  %v1915 = vmul.f32 %v1872, %v1903
  %v1916 = vmul.f32 %v1873, %v1903
  %v1917 = vmul.f32 %v1874, %v1903
  %v1918 = vmul.f32 %v1875, %v1903
  %v1919 = vmul.f32 %v1876, %v1903
  %v1920 = vmul.f32 %v1877, %v1903
  %v1921 = vmul.f32 %v1878, %v1903
  %v1922 = vmul.f32 %v1879, %v1903
  %v1923 = vmul.f32 %v1880, %v1903
  %v1924 = vmul.f32 %v1881, %v1903
  %v1925 = vmul.f32 %v1882, %v1903
  %v1926 = vmul.f32 %v1883, %v1903
  %v1927 = vmul.f32 %v1884, %v1903
  %v1928 = vmul.f32 %v1885, %v1903
  %v1929 = vmul.f32 %v1886, %v1903
  %v1930 = vmul.f32 %v1887, %v1903
  %v1931 = vmul.f32 %v1888, %v1903
  %v1932 = vmul.f32 %v1889, %v1903
  %v1933 = vmul.f32 %v1890, %v1903
  %v1934 = vmul.f32 %v1891, %v1903
  %v1935 = vmul.f32 %v1892, %v1903
  %v1937 = vperm.slane %v93, 0
  %v1939 = vmul.f32 %v1904, %v1937
  %v1940 = vmul.f32 %v1905, %v1937
  %v1941 = vmul.f32 %v1906, %v1937
  %v1942 = vmul.f32 %v1907, %v1937
  %v1943 = vmul.f32 %v1908, %v1937
  %v1944 = vmul.f32 %v1909, %v1937
  %v1945 = vmul.f32 %v1910, %v1937
  %v1946 = vmul.f32 %v1911, %v1937
  %v1947 = vmul.f32 %v1912, %v1937
  %v1948 = vmul.f32 %v1913, %v1937
  %v1949 = vmul.f32 %v1914, %v1937
  %v1950 = vmul.f32 %v1915, %v1937
  %v1951 = vmul.f32 %v1916, %v1937
  %v1952 = vmul.f32 %v1917, %v1937
  %v1953 = vmul.f32 %v1918, %v1937
  %v1954 = vmul.f32 %v1919, %v1937
  %v1955 = vmul.f32 %v1920, %v1937
  %v1956 = vmul.f32 %v1921, %v1937
  %v1957 = vmul.f32 %v1922, %v1937
  %v1958 = vmul.f32 %v1923, %v1937
  %v1959 = vmul.f32 %v1924, %v1937
  %v1960 = vmul.f32 %v1925, %v1937
  %v1961 = vmul.f32 %v1926, %v1937
  %v1962 = vmul.f32 %v1927, %v1937
  %v1963 = vmul.f32 %v1928, %v1937
  %v1964 = vmul.f32 %v1929, %v1937
  %v1965 = vmul.f32 %v1930, %v1937
  %v1966 = vmul.f32 %v1931, %v1937
  %v1967 = vmul.f32 %v1932, %v1937
  %v1968 = vmul.f32 %v1933, %v1937
  %v1969 = vmul.f32 %v1934, %v1937
  %v1970 = vmul.f32 %v1935, %v1937
  %v1972 = vperm.slane %v94, 0
  %v1974 = vadd.f32 %v1939, %v1972
  %v1975 = vadd.f32 %v1940, %v1972
  %v1976 = vadd.f32 %v1941, %v1972
  %v1977 = vadd.f32 %v1942, %v1972
  %v1978 = vadd.f32 %v1943, %v1972
  %v1979 = vadd.f32 %v1944, %v1972
  %v1980 = vadd.f32 %v1945, %v1972
  %v1981 = vadd.f32 %v1946, %v1972
  %v1982 = vadd.f32 %v1947, %v1972
  %v1983 = vadd.f32 %v1948, %v1972
  %v1984 = vadd.f32 %v1949, %v1972
  %v1985 = vadd.f32 %v1950, %v1972
  %v1986 = vadd.f32 %v1951, %v1972
  %v1987 = vadd.f32 %v1952, %v1972
  %v1988 = vadd.f32 %v1953, %v1972
  %v1989 = vadd.f32 %v1954, %v1972
  %v1990 = vadd.f32 %v1955, %v1972
  %v1991 = vadd.f32 %v1956, %v1972
  %v1992 = vadd.f32 %v1957, %v1972
  %v1993 = vadd.f32 %v1958, %v1972
  %v1994 = vadd.f32 %v1959, %v1972
  %v1995 = vadd.f32 %v1960, %v1972
  %v1996 = vadd.f32 %v1961, %v1972
  %v1997 = vadd.f32 %v1962, %v1972
  %v1998 = vadd.f32 %v1963, %v1972
  %v1999 = vadd.f32 %v1964, %v1972
  %v2000 = vadd.f32 %v1965, %v1972
  %v2001 = vadd.f32 %v1966, %v1972
  %v2002 = vadd.f32 %v1967, %v1972
  %v2003 = vadd.f32 %v1968, %v1972
  %v2004 = vadd.f32 %v1969, %v1972
  %v2005 = vadd.f32 %v1970, %v1972
  %vm2006 = vcmp.ge.f32.partialorder %v1974, 0.0
  %vm2007 = vcmp.ge.f32.partialorder %v1975, 0.0
  %vm2008 = vcmp.ge.f32.partialorder %v1976, 0.0
  %vm2009 = vcmp.ge.f32.partialorder %v1977, 0.0
  %vm2010 = vcmp.ge.f32.partialorder %v1978, 0.0
  %vm2011 = vcmp.ge.f32.partialorder %v1979, 0.0
  %vm2012 = vcmp.ge.f32.partialorder %v1980, 0.0
  %vm2013 = vcmp.ge.f32.partialorder %v1981, 0.0
  %vm2014 = vcmp.ge.f32.partialorder %v1982, 0.0
  %vm2015 = vcmp.ge.f32.partialorder %v1983, 0.0
  %vm2016 = vcmp.ge.f32.partialorder %v1984, 0.0
  %vm2017 = vcmp.ge.f32.partialorder %v1985, 0.0
  %vm2018 = vcmp.ge.f32.partialorder %v1986, 0.0
  %vm2019 = vcmp.ge.f32.partialorder %v1987, 0.0
  %vm2020 = vcmp.ge.f32.partialorder %v1988, 0.0
  %vm2021 = vcmp.ge.f32.partialorder %v1989, 0.0
  %vm2022 = vcmp.ge.f32.partialorder %v1990, 0.0
  %vm2023 = vcmp.ge.f32.partialorder %v1991, 0.0
  %vm2024 = vcmp.ge.f32.partialorder %v1992, 0.0
  %vm2025 = vcmp.ge.f32.partialorder %v1993, 0.0
  %vm2026 = vcmp.ge.f32.partialorder %v1994, 0.0
  %vm2027 = vcmp.ge.f32.partialorder %v1995, 0.0
  %vm2028 = vcmp.ge.f32.partialorder %v1996, 0.0
  %vm2029 = vcmp.ge.f32.partialorder %v1997, 0.0
  %vm2030 = vcmp.ge.f32.partialorder %v1998, 0.0
  %vm2031 = vcmp.ge.f32.partialorder %v1999, 0.0
  %vm2032 = vcmp.ge.f32.partialorder %v2000, 0.0
  %vm2033 = vcmp.ge.f32.partialorder %v2001, 0.0
  %vm2034 = vcmp.ge.f32.partialorder %v2002, 0.0
  %vm2035 = vcmp.ge.f32.partialorder %v2003, 0.0
  %vm2036 = vcmp.ge.f32.partialorder %v2004, 0.0
  %vm2037 = vcmp.ge.f32.partialorder %v2005, 0.0
  %v2038 = vmul.f32 %v1974, 0.2
  %v2039 = vmul.f32 %v1975, 0.2
  %v2040 = vmul.f32 %v1976, 0.2
  %v2041 = vmul.f32 %v1977, 0.2
  %v2042 = vmul.f32 %v1978, 0.2
  %v2043 = vmul.f32 %v1979, 0.2
  %v2044 = vmul.f32 %v1980, 0.2
  %v2045 = vmul.f32 %v1981, 0.2
  %v2046 = vmul.f32 %v1982, 0.2
  %v2047 = vmul.f32 %v1983, 0.2
  %v2048 = vmul.f32 %v1984, 0.2
  %v2049 = vmul.f32 %v1985, 0.2
  %v2050 = vmul.f32 %v1986, 0.2
  %v2051 = vmul.f32 %v1987, 0.2
  %v2052 = vmul.f32 %v1988, 0.2
  %v2053 = vmul.f32 %v1989, 0.2
  %v2054 = vmul.f32 %v1990, 0.2
  %v2055 = vmul.f32 %v1991, 0.2
  %v2056 = vmul.f32 %v1992, 0.2
  %v2057 = vmul.f32 %v1993, 0.2
  %v2058 = vmul.f32 %v1994, 0.2
  %v2059 = vmul.f32 %v1995, 0.2
  %v2060 = vmul.f32 %v1996, 0.2
  %v2061 = vmul.f32 %v1997, 0.2
  %v2062 = vmul.f32 %v1998, 0.2
  %v2063 = vmul.f32 %v1999, 0.2
  %v2064 = vmul.f32 %v2000, 0.2
  %v2065 = vmul.f32 %v2001, 0.2
  %v2066 = vmul.f32 %v2002, 0.2
  %v2067 = vmul.f32 %v2003, 0.2
  %v2068 = vmul.f32 %v2004, 0.2
  %v2069 = vmul.f32 %v2005, 0.2
  %v2070 = vsel %vm2006, %v1974, %v2038
  %v2071 = vsel %vm2007, %v1975, %v2039
  %v2072 = vsel %vm2008, %v1976, %v2040
  %v2073 = vsel %vm2009, %v1977, %v2041
  %v2074 = vsel %vm2010, %v1978, %v2042
  %v2075 = vsel %vm2011, %v1979, %v2043
  %v2076 = vsel %vm2012, %v1980, %v2044
  %v2077 = vsel %vm2013, %v1981, %v2045
  %v2078 = vsel %vm2014, %v1982, %v2046
  %v2079 = vsel %vm2015, %v1983, %v2047
  %v2080 = vsel %vm2016, %v1984, %v2048
  %v2081 = vsel %vm2017, %v1985, %v2049
  %v2082 = vsel %vm2018, %v1986, %v2050
  %v2083 = vsel %vm2019, %v1987, %v2051
  %v2084 = vsel %vm2020, %v1988, %v2052
  %v2085 = vsel %vm2021, %v1989, %v2053
  %v2086 = vsel %vm2022, %v1990, %v2054
  %v2087 = vsel %vm2023, %v1991, %v2055
  %v2088 = vsel %vm2024, %v1992, %v2056
  %v2089 = vsel %vm2025, %v1993, %v2057
  %v2090 = vsel %vm2026, %v1994, %v2058
  %v2091 = vsel %vm2027, %v1995, %v2059
  %v2092 = vsel %vm2028, %v1996, %v2060
  %v2093 = vsel %vm2029, %v1997, %v2061
  %v2094 = vsel %vm2030, %v1998, %v2062
  %v2095 = vsel %vm2031, %v1999, %v2063
  %v2096 = vsel %vm2032, %v2000, %v2064
  %v2097 = vsel %vm2033, %v2001, %v2065
  %v2098 = vsel %vm2034, %v2002, %v2066
  %v2099 = vsel %vm2035, %v2003, %v2067
  %v2100 = vsel %vm2036, %v2004, %v2068
  %v2101 = vsel %vm2037, %v2005, %v2069
  %v2103 = vperm.slane %v95, 0
  %v2105 = vmul.f32 %v2070, %v2103
  %v2106 = vmul.f32 %v2071, %v2103
  %v2107 = vmul.f32 %v2072, %v2103
  %v2108 = vmul.f32 %v2073, %v2103
  %v2109 = vmul.f32 %v2074, %v2103
  %v2110 = vmul.f32 %v2075, %v2103
  %v2111 = vmul.f32 %v2076, %v2103
  %v2112 = vmul.f32 %v2077, %v2103
  %v2113 = vmul.f32 %v2078, %v2103
  %v2114 = vmul.f32 %v2079, %v2103
  %v2115 = vmul.f32 %v2080, %v2103
  %v2116 = vmul.f32 %v2081, %v2103
  %v2117 = vmul.f32 %v2082, %v2103
  %v2118 = vmul.f32 %v2083, %v2103
  %v2119 = vmul.f32 %v2084, %v2103
  %v2120 = vmul.f32 %v2085, %v2103
  %v2121 = vmul.f32 %v2086, %v2103
  %v2122 = vmul.f32 %v2087, %v2103
  %v2123 = vmul.f32 %v2088, %v2103
  %v2124 = vmul.f32 %v2089, %v2103
  %v2125 = vmul.f32 %v2090, %v2103
  %v2126 = vmul.f32 %v2091, %v2103
  %v2127 = vmul.f32 %v2092, %v2103
  %v2128 = vmul.f32 %v2093, %v2103
  %v2129 = vmul.f32 %v2094, %v2103
  %v2130 = vmul.f32 %v2095, %v2103
  %v2131 = vmul.f32 %v2096, %v2103
  %v2132 = vmul.f32 %v2097, %v2103
  %v2133 = vmul.f32 %v2098, %v2103
  %v2134 = vmul.f32 %v2099, %v2103
  %v2135 = vmul.f32 %v2100, %v2103
  %v2136 = vmul.f32 %v2101, %v2103
  %v2137 = vsel %vm1685, %v2105, 0.0
  %2138 = vadd.xlane.f32.xlu0 %v2137
  %v2139 = vpop.xlane.xlu0 %2138
  %v2140 = vsel %vm1685, %v2106, 0.0
  %2141 = vadd.xlane.f32.xlu0 %v2140
  %v2142 = vpop.xlane.xlu0 %2141
  %v2143 = vsel %vm1685, %v2107, 0.0
  %2144 = vadd.xlane.f32.xlu0 %v2143
  %v2145 = vpop.xlane.xlu0 %2144
  %v2146 = vsel %vm1685, %v2108, 0.0
  %2147 = vadd.xlane.f32.xlu0 %v2146
  %v2148 = vpop.xlane.xlu0 %2147
  %v2149 = vsel %vm1685, %v2109, 0.0
  %2150 = vadd.xlane.f32.xlu0 %v2149
  %v2151 = vpop.xlane.xlu0 %2150
  %v2152 = vsel %vm1685, %v2110, 0.0
  %2153 = vadd.xlane.f32.xlu0 %v2152
  %v2154 = vpop.xlane.xlu0 %2153
  %v2155 = vsel %vm1685, %v2111, 0.0
  %2156 = vadd.xlane.f32.xlu0 %v2155
  %v2157 = vpop.xlane.xlu0 %2156
  %v2158 = vsel %vm1685, %v2112, 0.0
  %2159 = vadd.xlane.f32.xlu0 %v2158
  %v2160 = vpop.xlane.xlu0 %2159
  %v2161 = vsel %vm1685, %v2113, 0.0
  %2162 = vadd.xlane.f32.xlu0 %v2161
  %v2163 = vpop.xlane.xlu0 %2162
  %v2164 = vsel %vm1685, %v2114, 0.0
  %2165 = vadd.xlane.f32.xlu0 %v2164
  %v2166 = vpop.xlane.xlu0 %2165
  %v2167 = vsel %vm1685, %v2115, 0.0
  %2168 = vadd.xlane.f32.xlu0 %v2167
  %v2169 = vpop.xlane.xlu0 %2168
  %v2170 = vsel %vm1685, %v2116, 0.0
  %2171 = vadd.xlane.f32.xlu0 %v2170
  %v2172 = vpop.xlane.xlu0 %2171
  %v2173 = vsel %vm1685, %v2117, 0.0
  %2174 = vadd.xlane.f32.xlu0 %v2173
  %v2175 = vpop.xlane.xlu0 %2174
  %v2176 = vsel %vm1685, %v2118, 0.0
  %2177 = vadd.xlane.f32.xlu0 %v2176
  %v2178 = vpop.xlane.xlu0 %2177
  %v2179 = vsel %vm1685, %v2119, 0.0
  %2180 = vadd.xlane.f32.xlu0 %v2179
  %v2181 = vpop.xlane.xlu0 %2180
  %v2182 = vsel %vm1685, %v2120, 0.0
  %2183 = vadd.xlane.f32.xlu0 %v2182
  %v2184 = vpop.xlane.xlu0 %2183
  %v2185 = vsel %vm1685, %v2121, 0.0
  %2186 = vadd.xlane.f32.xlu0 %v2185
  %v2187 = vpop.xlane.xlu0 %2186
  %v2188 = vsel %vm1685, %v2122, 0.0
  %2189 = vadd.xlane.f32.xlu0 %v2188
  %v2190 = vpop.xlane.xlu0 %2189
  %v2191 = vsel %vm1685, %v2123, 0.0
  %2192 = vadd.xlane.f32.xlu0 %v2191
  %v2193 = vpop.xlane.xlu0 %2192
  %v2194 = vsel %vm1685, %v2124, 0.0
  %2195 = vadd.xlane.f32.xlu0 %v2194
  %v2196 = vpop.xlane.xlu0 %2195
  %v2197 = vsel %vm1685, %v2125, 0.0
  %2198 = vadd.xlane.f32.xlu0 %v2197
  %v2199 = vpop.xlane.xlu0 %2198
  %v2200 = vsel %vm1685, %v2126, 0.0
  %2201 = vadd.xlane.f32.xlu0 %v2200
  %v2202 = vpop.xlane.xlu0 %2201
  %v2203 = vsel %vm1685, %v2127, 0.0
  %2204 = vadd.xlane.f32.xlu0 %v2203
  %v2205 = vpop.xlane.xlu0 %2204
  %v2206 = vsel %vm1685, %v2128, 0.0
  %2207 = vadd.xlane.f32.xlu0 %v2206
  %v2208 = vpop.xlane.xlu0 %2207
  %v2209 = vsel %vm1685, %v2129, 0.0
  %2210 = vadd.xlane.f32.xlu0 %v2209
  %v2211 = vpop.xlane.xlu0 %2210
  %v2212 = vsel %vm1685, %v2130, 0.0
  %2213 = vadd.xlane.f32.xlu0 %v2212
  %v2214 = vpop.xlane.xlu0 %2213
  %v2215 = vsel %vm1685, %v2131, 0.0
  %2216 = vadd.xlane.f32.xlu0 %v2215
  %v2217 = vpop.xlane.xlu0 %2216
  %v2218 = vsel %vm1685, %v2132, 0.0
  %2219 = vadd.xlane.f32.xlu0 %v2218
  %v2220 = vpop.xlane.xlu0 %2219
  %v2221 = vsel %vm1685, %v2133, 0.0
  %2222 = vadd.xlane.f32.xlu0 %v2221
  %v2223 = vpop.xlane.xlu0 %2222
  %v2224 = vsel %vm1685, %v2134, 0.0
  %2225 = vadd.xlane.f32.xlu0 %v2224
  %v2226 = vpop.xlane.xlu0 %2225
  %v2227 = vsel %vm1685, %v2135, 0.0
  %2228 = vadd.xlane.f32.xlu0 %v2227
  %v2229 = vpop.xlane.xlu0 %2228
  %v2230 = vsel %vm1685, %v2136, 0.0
  %2231 = vadd.xlane.f32.xlu0 %v2230
  %v2232 = vpop.xlane.xlu0 %2231
  %v2234 = vperm.slane %v96, 0
  %v2236 = vadd.f32 %v2139, %v2234
  %v2237 = vadd.f32 %v2142, %v2234
  %v2238 = vadd.f32 %v2145, %v2234
  %v2239 = vadd.f32 %v2148, %v2234
  %v2240 = vadd.f32 %v2151, %v2234
  %v2241 = vadd.f32 %v2154, %v2234
  %v2242 = vadd.f32 %v2157, %v2234
  %v2243 = vadd.f32 %v2160, %v2234
  %v2244 = vadd.f32 %v2163, %v2234
  %v2245 = vadd.f32 %v2166, %v2234
  %v2246 = vadd.f32 %v2169, %v2234
  %v2247 = vadd.f32 %v2172, %v2234
  %v2248 = vadd.f32 %v2175, %v2234
  %v2249 = vadd.f32 %v2178, %v2234
  %v2250 = vadd.f32 %v2181, %v2234
  %v2251 = vadd.f32 %v2184, %v2234
  %v2252 = vadd.f32 %v2187, %v2234
  %v2253 = vadd.f32 %v2190, %v2234
  %v2254 = vadd.f32 %v2193, %v2234
  %v2255 = vadd.f32 %v2196, %v2234
  %v2256 = vadd.f32 %v2199, %v2234
  %v2257 = vadd.f32 %v2202, %v2234
  %v2258 = vadd.f32 %v2205, %v2234
  %v2259 = vadd.f32 %v2208, %v2234
  %v2260 = vadd.f32 %v2211, %v2234
  %v2261 = vadd.f32 %v2214, %v2234
  %v2262 = vadd.f32 %v2217, %v2234
  %v2263 = vadd.f32 %v2220, %v2234
  %v2264 = vadd.f32 %v2223, %v2234
  %v2265 = vadd.f32 %v2226, %v2234
  %v2266 = vadd.f32 %v2229, %v2234
  %v2267 = vadd.f32 %v2232, %v2234
  %v2268 = vand.u32 2147483647, %v2236
  %v2269 = vand.u32 2147483647, %v2237
  %v2270 = vand.u32 2147483647, %v2238
  %v2271 = vand.u32 2147483647, %v2239
  %v2272 = vand.u32 2147483647, %v2240
  %v2273 = vand.u32 2147483647, %v2241
  %v2274 = vand.u32 2147483647, %v2242
  %v2275 = vand.u32 2147483647, %v2243
  %v2276 = vand.u32 2147483647, %v2244
  %v2277 = vand.u32 2147483647, %v2245
  %v2278 = vand.u32 2147483647, %v2246
  %v2279 = vand.u32 2147483647, %v2247
  %v2280 = vand.u32 2147483647, %v2248
  %v2281 = vand.u32 2147483647, %v2249
  %v2282 = vand.u32 2147483647, %v2250
  %v2283 = vand.u32 2147483647, %v2251
  %v2284 = vand.u32 2147483647, %v2252
  %v2285 = vand.u32 2147483647, %v2253
  %v2286 = vand.u32 2147483647, %v2254
  %v2287 = vand.u32 2147483647, %v2255
  %v2288 = vand.u32 2147483647, %v2256
  %v2289 = vand.u32 2147483647, %v2257
  %v2290 = vand.u32 2147483647, %v2258
  %v2291 = vand.u32 2147483647, %v2259
  %v2292 = vand.u32 2147483647, %v2260
  %v2293 = vand.u32 2147483647, %v2261
  %v2294 = vand.u32 2147483647, %v2262
  %v2295 = vand.u32 2147483647, %v2263
  %v2296 = vand.u32 2147483647, %v2264
  %v2297 = vand.u32 2147483647, %v2265
  %v2298 = vand.u32 2147483647, %v2266
  %v2299 = vand.u32 2147483647, %v2267
  %v2300 = vsub.f32 0.0, %v2268
  %v2301 = vsub.f32 0.0, %v2269
  %v2302 = vsub.f32 0.0, %v2270
  %v2303 = vsub.f32 0.0, %v2271
  %v2304 = vsub.f32 0.0, %v2272
  %v2305 = vsub.f32 0.0, %v2273
  %v2306 = vsub.f32 0.0, %v2274
  %v2307 = vsub.f32 0.0, %v2275
  %v2308 = vsub.f32 0.0, %v2276
  %v2309 = vsub.f32 0.0, %v2277
  %v2310 = vsub.f32 0.0, %v2278
  %v2311 = vsub.f32 0.0, %v2279
  %v2312 = vsub.f32 0.0, %v2280
  %v2313 = vsub.f32 0.0, %v2281
  %v2314 = vsub.f32 0.0, %v2282
  %v2315 = vsub.f32 0.0, %v2283
  %v2316 = vsub.f32 0.0, %v2284
  %v2317 = vsub.f32 0.0, %v2285
  %v2318 = vsub.f32 0.0, %v2286
  %v2319 = vsub.f32 0.0, %v2287
  %v2320 = vsub.f32 0.0, %v2288
  %v2321 = vsub.f32 0.0, %v2289
  %v2322 = vsub.f32 0.0, %v2290
  %v2323 = vsub.f32 0.0, %v2291
  %v2324 = vsub.f32 0.0, %v2292
  %v2325 = vsub.f32 0.0, %v2293
  %v2326 = vsub.f32 0.0, %v2294
  %v2327 = vsub.f32 0.0, %v2295
  %v2328 = vsub.f32 0.0, %v2296
  %v2329 = vsub.f32 0.0, %v2297
  %v2330 = vsub.f32 0.0, %v2298
  %v2331 = vsub.f32 0.0, %v2299
  %v2332 = vmul.f32 %v2300, 1.442695
  %v2333 = vpow.pop %v2332
  %v2334 = vmul.f32 %v2301, 1.442695
  %v2335 = vpow.pop %v2334
  %v2336 = vmul.f32 %v2302, 1.442695
  %v2337 = vpow.pop %v2336
  %v2338 = vmul.f32 %v2303, 1.442695
  %v2339 = vpow.pop %v2338
  %v2340 = vmul.f32 %v2304, 1.442695
  %v2341 = vpow.pop %v2340
  %v2342 = vmul.f32 %v2305, 1.442695
  %v2343 = vpow.pop %v2342
  %v2344 = vmul.f32 %v2306, 1.442695
  %v2345 = vpow.pop %v2344
  %v2346 = vmul.f32 %v2307, 1.442695
  %v2347 = vpow.pop %v2346
  %v2348 = vmul.f32 %v2308, 1.442695
  %v2349 = vpow.pop %v2348
  %v2350 = vmul.f32 %v2309, 1.442695
  %v2351 = vpow.pop %v2350
  %v2352 = vmul.f32 %v2310, 1.442695
  %v2353 = vpow.pop %v2352
  %v2354 = vmul.f32 %v2311, 1.442695
  %v2355 = vpow.pop %v2354
  %v2356 = vmul.f32 %v2312, 1.442695
  %v2357 = vpow.pop %v2356
  %v2358 = vmul.f32 %v2313, 1.442695
  %v2359 = vpow.pop %v2358
  %v2360 = vmul.f32 %v2314, 1.442695
  %v2361 = vpow.pop %v2360
  %v2362 = vmul.f32 %v2315, 1.442695
  %v2363 = vpow.pop %v2362
  %v2364 = vmul.f32 %v2316, 1.442695
  %v2365 = vpow.pop %v2364
  %v2366 = vmul.f32 %v2317, 1.442695
  %v2367 = vpow.pop %v2366
  %v2368 = vmul.f32 %v2318, 1.442695
  %v2369 = vpow.pop %v2368
  %v2370 = vmul.f32 %v2319, 1.442695
  %v2371 = vpow.pop %v2370
  %v2372 = vmul.f32 %v2320, 1.442695
  %v2373 = vpow.pop %v2372
  %v2374 = vmul.f32 %v2321, 1.442695
  %v2375 = vpow.pop %v2374
  %v2376 = vmul.f32 %v2322, 1.442695
  %v2377 = vpow.pop %v2376
  %v2378 = vmul.f32 %v2323, 1.442695
  %v2379 = vpow.pop %v2378
  %v2380 = vmul.f32 %v2324, 1.442695
  %v2381 = vpow.pop %v2380
  %v2382 = vmul.f32 %v2325, 1.442695
  %v2383 = vpow.pop %v2382
  %v2384 = vmul.f32 %v2326, 1.442695
  %v2385 = vpow.pop %v2384
  %v2386 = vmul.f32 %v2327, 1.442695
  %v2387 = vpow.pop %v2386
  %v2388 = vmul.f32 %v2328, 1.442695
  %v2389 = vpow.pop %v2388
  %v2390 = vmul.f32 %v2329, 1.442695
  %v2391 = vpow.pop %v2390
  %v2392 = vmul.f32 %v2330, 1.442695
  %v2393 = vpow.pop %v2392
  %v2394 = vmul.f32 %v2331, 1.442695
  %v2395 = vpow.pop %v2394
  %vm2396 = vcmp.ge.f32.partialorder %v2236, 0.0
  %vm2397 = vcmp.ge.f32.partialorder %v2237, 0.0
  %vm2398 = vcmp.ge.f32.partialorder %v2238, 0.0
  %vm2399 = vcmp.ge.f32.partialorder %v2239, 0.0
  %vm2400 = vcmp.ge.f32.partialorder %v2240, 0.0
  %vm2401 = vcmp.ge.f32.partialorder %v2241, 0.0
  %vm2402 = vcmp.ge.f32.partialorder %v2242, 0.0
  %vm2403 = vcmp.ge.f32.partialorder %v2243, 0.0
  %vm2404 = vcmp.ge.f32.partialorder %v2244, 0.0
  %vm2405 = vcmp.ge.f32.partialorder %v2245, 0.0
  %vm2406 = vcmp.ge.f32.partialorder %v2246, 0.0
  %vm2407 = vcmp.ge.f32.partialorder %v2247, 0.0
  %vm2408 = vcmp.ge.f32.partialorder %v2248, 0.0
  %vm2409 = vcmp.ge.f32.partialorder %v2249, 0.0
  %vm2410 = vcmp.ge.f32.partialorder %v2250, 0.0
  %vm2411 = vcmp.ge.f32.partialorder %v2251, 0.0
  %vm2412 = vcmp.ge.f32.partialorder %v2252, 0.0
  %vm2413 = vcmp.ge.f32.partialorder %v2253, 0.0
  %vm2414 = vcmp.ge.f32.partialorder %v2254, 0.0
  %vm2415 = vcmp.ge.f32.partialorder %v2255, 0.0
  %vm2416 = vcmp.ge.f32.partialorder %v2256, 0.0
  %vm2417 = vcmp.ge.f32.partialorder %v2257, 0.0
  %vm2418 = vcmp.ge.f32.partialorder %v2258, 0.0
  %vm2419 = vcmp.ge.f32.partialorder %v2259, 0.0
  %vm2420 = vcmp.ge.f32.partialorder %v2260, 0.0
  %vm2421 = vcmp.ge.f32.partialorder %v2261, 0.0
  %vm2422 = vcmp.ge.f32.partialorder %v2262, 0.0
  %vm2423 = vcmp.ge.f32.partialorder %v2263, 0.0
  %vm2424 = vcmp.ge.f32.partialorder %v2264, 0.0
  %vm2425 = vcmp.ge.f32.partialorder %v2265, 0.0
  %vm2426 = vcmp.ge.f32.partialorder %v2266, 0.0
  %vm2427 = vcmp.ge.f32.partialorder %v2267, 0.0
  %v2428 = vsel %vm2396, 1.0, %v2333
  %v2429 = vsel %vm2397, 1.0, %v2335
  %v2430 = vsel %vm2398, 1.0, %v2337
  %v2431 = vsel %vm2399, 1.0, %v2339
  %v2432 = vsel %vm2400, 1.0, %v2341
  %v2433 = vsel %vm2401, 1.0, %v2343
  %v2434 = vsel %vm2402, 1.0, %v2345
  %v2435 = vsel %vm2403, 1.0, %v2347
  %v2436 = vsel %vm2404, 1.0, %v2349
  %v2437 = vsel %vm2405, 1.0, %v2351
  %v2438 = vsel %vm2406, 1.0, %v2353
  %v2439 = vsel %vm2407, 1.0, %v2355
  %v2440 = vsel %vm2408, 1.0, %v2357
  %v2441 = vsel %vm2409, 1.0, %v2359
  %v2442 = vsel %vm2410, 1.0, %v2361
  %v2443 = vsel %vm2411, 1.0, %v2363
  %v2444 = vsel %vm2412, 1.0, %v2365
  %v2445 = vsel %vm2413, 1.0, %v2367
  %v2446 = vsel %vm2414, 1.0, %v2369
  %v2447 = vsel %vm2415, 1.0, %v2371
  %v2448 = vsel %vm2416, 1.0, %v2373
  %v2449 = vsel %vm2417, 1.0, %v2375
  %v2450 = vsel %vm2418, 1.0, %v2377
  %v2451 = vsel %vm2419, 1.0, %v2379
  %v2452 = vsel %vm2420, 1.0, %v2381
  %v2453 = vsel %vm2421, 1.0, %v2383
  %v2454 = vsel %vm2422, 1.0, %v2385
  %v2455 = vsel %vm2423, 1.0, %v2387
  %v2456 = vsel %vm2424, 1.0, %v2389
  %v2457 = vsel %vm2425, 1.0, %v2391
  %v2458 = vsel %vm2426, 1.0, %v2393
  %v2459 = vsel %vm2427, 1.0, %v2395
  %v2460 = vadd.f32 %v2333, 1.0
  %v2461 = vadd.f32 %v2335, 1.0
  %v2462 = vadd.f32 %v2337, 1.0
  %v2463 = vadd.f32 %v2339, 1.0
  %v2464 = vadd.f32 %v2341, 1.0
  %v2465 = vadd.f32 %v2343, 1.0
  %v2466 = vadd.f32 %v2345, 1.0
  %v2467 = vadd.f32 %v2347, 1.0
  %v2468 = vadd.f32 %v2349, 1.0
  %v2469 = vadd.f32 %v2351, 1.0
  %v2470 = vadd.f32 %v2353, 1.0
  %v2471 = vadd.f32 %v2355, 1.0
  %v2472 = vadd.f32 %v2357, 1.0
  %v2473 = vadd.f32 %v2359, 1.0
  %v2474 = vadd.f32 %v2361, 1.0
  %v2475 = vadd.f32 %v2363, 1.0
  %v2476 = vadd.f32 %v2365, 1.0
  %v2477 = vadd.f32 %v2367, 1.0
  %v2478 = vadd.f32 %v2369, 1.0
  %v2479 = vadd.f32 %v2371, 1.0
  %v2480 = vadd.f32 %v2373, 1.0
  %v2481 = vadd.f32 %v2375, 1.0
  %v2482 = vadd.f32 %v2377, 1.0
  %v2483 = vadd.f32 %v2379, 1.0
  %v2484 = vadd.f32 %v2381, 1.0
  %v2485 = vadd.f32 %v2383, 1.0
  %v2486 = vadd.f32 %v2385, 1.0
  %v2487 = vadd.f32 %v2387, 1.0
  %v2488 = vadd.f32 %v2389, 1.0
  %v2489 = vadd.f32 %v2391, 1.0
  %v2490 = vadd.f32 %v2393, 1.0
  %v2491 = vadd.f32 %v2395, 1.0
  %v2492 = vrcp.pop %v2460
  %v2493 = vmul.f32 %v2460, %v2492
  %v2494 = vsub.f32 1.0, %v2493
  %v2495 = vmul.f32 %v2492, %v2494
  %v2496 = vadd.f32 %v2492, %v2495
  %vm2497 = vweird.f32 %v2460
  %vm2498 = vweird.f32 %v2492
  %vm2499 = vmor %vm2497, %vm2498
  %v2500 = vsel %vm2499, %v2492, %v2496
  %v2501 = vand.u32 2147483647, %v2460
  %vm2502 = vcmp.eq.f32.partialorder %v2501, 8.507059e+37
  %v2503 = vand.u32 %v2460, 2147483648
  %v2504 = vor.u32 1.1754944e-38, %v2503
  %v2505 = vsel %vm2502, %v2504, %v2500
  %v2506 = vmul.f32 %v2428, %v2505
  %v2507 = vrcp.pop %v2461
  %v2508 = vmul.f32 %v2461, %v2507
  %v2509 = vsub.f32 1.0, %v2508
  %v2510 = vmul.f32 %v2507, %v2509
  %v2511 = vadd.f32 %v2507, %v2510
  %vm2512 = vweird.f32 %v2461
  %vm2513 = vweird.f32 %v2507
  %vm2514 = vmor %vm2512, %vm2513
  %v2515 = vsel %vm2514, %v2507, %v2511
  %v2516 = vand.u32 2147483647, %v2461
  %vm2517 = vcmp.eq.f32.partialorder %v2516, 8.507059e+37
  %v2518 = vand.u32 %v2461, 2147483648
  %v2519 = vor.u32 1.1754944e-38, %v2518
  %v2520 = vsel %vm2517, %v2519, %v2515
  %v2521 = vmul.f32 %v2429, %v2520
  %v2522 = vrcp.pop %v2462
  %v2523 = vmul.f32 %v2462, %v2522
  %v2524 = vsub.f32 1.0, %v2523
  %v2525 = vmul.f32 %v2522, %v2524
  %v2526 = vadd.f32 %v2522, %v2525
  %vm2527 = vweird.f32 %v2462
  %vm2528 = vweird.f32 %v2522
  %vm2529 = vmor %vm2527, %vm2528
  %v2530 = vsel %vm2529, %v2522, %v2526
  %v2531 = vand.u32 2147483647, %v2462
  %vm2532 = vcmp.eq.f32.partialorder %v2531, 8.507059e+37
  %v2533 = vand.u32 %v2462, 2147483648
  %v2534 = vor.u32 1.1754944e-38, %v2533
  %v2535 = vsel %vm2532, %v2534, %v2530
  %v2536 = vmul.f32 %v2430, %v2535
  %v2537 = vrcp.pop %v2463
  %v2538 = vmul.f32 %v2463, %v2537
  %v2539 = vsub.f32 1.0, %v2538
  %v2540 = vmul.f32 %v2537, %v2539
  %v2541 = vadd.f32 %v2537, %v2540
  %vm2542 = vweird.f32 %v2463
  %vm2543 = vweird.f32 %v2537
  %vm2544 = vmor %vm2542, %vm2543
  %v2545 = vsel %vm2544, %v2537, %v2541
  %v2546 = vand.u32 2147483647, %v2463
  %vm2547 = vcmp.eq.f32.partialorder %v2546, 8.507059e+37
  %v2548 = vand.u32 %v2463, 2147483648
  %v2549 = vor.u32 1.1754944e-38, %v2548
  %v2550 = vsel %vm2547, %v2549, %v2545
  %v2551 = vmul.f32 %v2431, %v2550
  %v2552 = vrcp.pop %v2464
  %v2553 = vmul.f32 %v2464, %v2552
  %v2554 = vsub.f32 1.0, %v2553
  %v2555 = vmul.f32 %v2552, %v2554
  %v2556 = vadd.f32 %v2552, %v2555
  %vm2557 = vweird.f32 %v2464
  %vm2558 = vweird.f32 %v2552
  %vm2559 = vmor %vm2557, %vm2558
  %v2560 = vsel %vm2559, %v2552, %v2556
  %v2561 = vand.u32 2147483647, %v2464
  %vm2562 = vcmp.eq.f32.partialorder %v2561, 8.507059e+37
  %v2563 = vand.u32 %v2464, 2147483648
  %v2564 = vor.u32 1.1754944e-38, %v2563
  %v2565 = vsel %vm2562, %v2564, %v2560
  %v2566 = vmul.f32 %v2432, %v2565
  %v2567 = vrcp.pop %v2465
  %v2568 = vmul.f32 %v2465, %v2567
  %v2569 = vsub.f32 1.0, %v2568
  %v2570 = vmul.f32 %v2567, %v2569
  %v2571 = vadd.f32 %v2567, %v2570
  %vm2572 = vweird.f32 %v2465
  %vm2573 = vweird.f32 %v2567
  %vm2574 = vmor %vm2572, %vm2573
  %v2575 = vsel %vm2574, %v2567, %v2571
  %v2576 = vand.u32 2147483647, %v2465
  %vm2577 = vcmp.eq.f32.partialorder %v2576, 8.507059e+37
  %v2578 = vand.u32 %v2465, 2147483648
  %v2579 = vor.u32 1.1754944e-38, %v2578
  %v2580 = vsel %vm2577, %v2579, %v2575
  %v2581 = vmul.f32 %v2433, %v2580
  %v2582 = vrcp.pop %v2466
  %v2583 = vmul.f32 %v2466, %v2582
  %v2584 = vsub.f32 1.0, %v2583
  %v2585 = vmul.f32 %v2582, %v2584
  %v2586 = vadd.f32 %v2582, %v2585
  %vm2587 = vweird.f32 %v2466
  %vm2588 = vweird.f32 %v2582
  %vm2589 = vmor %vm2587, %vm2588
  %v2590 = vsel %vm2589, %v2582, %v2586
  %v2591 = vand.u32 2147483647, %v2466
  %vm2592 = vcmp.eq.f32.partialorder %v2591, 8.507059e+37
  %v2593 = vand.u32 %v2466, 2147483648
  %v2594 = vor.u32 1.1754944e-38, %v2593
  %v2595 = vsel %vm2592, %v2594, %v2590
  %v2596 = vmul.f32 %v2434, %v2595
  %v2597 = vrcp.pop %v2467
  %v2598 = vmul.f32 %v2467, %v2597
  %v2599 = vsub.f32 1.0, %v2598
  %v2600 = vmul.f32 %v2597, %v2599
  %v2601 = vadd.f32 %v2597, %v2600
  %vm2602 = vweird.f32 %v2467
  %vm2603 = vweird.f32 %v2597
  %vm2604 = vmor %vm2602, %vm2603
  %v2605 = vsel %vm2604, %v2597, %v2601
  %v2606 = vand.u32 2147483647, %v2467
  %vm2607 = vcmp.eq.f32.partialorder %v2606, 8.507059e+37
  %v2608 = vand.u32 %v2467, 2147483648
  %v2609 = vor.u32 1.1754944e-38, %v2608
  %v2610 = vsel %vm2607, %v2609, %v2605
  %v2611 = vmul.f32 %v2435, %v2610
  %v2612 = vrcp.pop %v2468
  %v2613 = vmul.f32 %v2468, %v2612
  %v2614 = vsub.f32 1.0, %v2613
  %v2615 = vmul.f32 %v2612, %v2614
  %v2616 = vadd.f32 %v2612, %v2615
  %vm2617 = vweird.f32 %v2468
  %vm2618 = vweird.f32 %v2612
  %vm2619 = vmor %vm2617, %vm2618
  %v2620 = vsel %vm2619, %v2612, %v2616
  %v2621 = vand.u32 2147483647, %v2468
  %vm2622 = vcmp.eq.f32.partialorder %v2621, 8.507059e+37
  %v2623 = vand.u32 %v2468, 2147483648
  %v2624 = vor.u32 1.1754944e-38, %v2623
  %v2625 = vsel %vm2622, %v2624, %v2620
  %v2626 = vmul.f32 %v2436, %v2625
  %v2627 = vrcp.pop %v2469
  %v2628 = vmul.f32 %v2469, %v2627
  %v2629 = vsub.f32 1.0, %v2628
  %v2630 = vmul.f32 %v2627, %v2629
  %v2631 = vadd.f32 %v2627, %v2630
  %vm2632 = vweird.f32 %v2469
  %vm2633 = vweird.f32 %v2627
  %vm2634 = vmor %vm2632, %vm2633
  %v2635 = vsel %vm2634, %v2627, %v2631
  %v2636 = vand.u32 2147483647, %v2469
  %vm2637 = vcmp.eq.f32.partialorder %v2636, 8.507059e+37
  %v2638 = vand.u32 %v2469, 2147483648
  %v2639 = vor.u32 1.1754944e-38, %v2638
  %v2640 = vsel %vm2637, %v2639, %v2635
  %v2641 = vmul.f32 %v2437, %v2640
  %v2642 = vrcp.pop %v2470
  %v2643 = vmul.f32 %v2470, %v2642
  %v2644 = vsub.f32 1.0, %v2643
  %v2645 = vmul.f32 %v2642, %v2644
  %v2646 = vadd.f32 %v2642, %v2645
  %vm2647 = vweird.f32 %v2470
  %vm2648 = vweird.f32 %v2642
  %vm2649 = vmor %vm2647, %vm2648
  %v2650 = vsel %vm2649, %v2642, %v2646
  %v2651 = vand.u32 2147483647, %v2470
  %vm2652 = vcmp.eq.f32.partialorder %v2651, 8.507059e+37
  %v2653 = vand.u32 %v2470, 2147483648
  %v2654 = vor.u32 1.1754944e-38, %v2653
  %v2655 = vsel %vm2652, %v2654, %v2650
  %v2656 = vmul.f32 %v2438, %v2655
  %v2657 = vrcp.pop %v2471
  %v2658 = vmul.f32 %v2471, %v2657
  %v2659 = vsub.f32 1.0, %v2658
  %v2660 = vmul.f32 %v2657, %v2659
  %v2661 = vadd.f32 %v2657, %v2660
  %vm2662 = vweird.f32 %v2471
  %vm2663 = vweird.f32 %v2657
  %vm2664 = vmor %vm2662, %vm2663
  %v2665 = vsel %vm2664, %v2657, %v2661
  %v2666 = vand.u32 2147483647, %v2471
  %vm2667 = vcmp.eq.f32.partialorder %v2666, 8.507059e+37
  %v2668 = vand.u32 %v2471, 2147483648
  %v2669 = vor.u32 1.1754944e-38, %v2668
  %v2670 = vsel %vm2667, %v2669, %v2665
  %v2671 = vmul.f32 %v2439, %v2670
  %v2672 = vrcp.pop %v2472
  %v2673 = vmul.f32 %v2472, %v2672
  %v2674 = vsub.f32 1.0, %v2673
  %v2675 = vmul.f32 %v2672, %v2674
  %v2676 = vadd.f32 %v2672, %v2675
  %vm2677 = vweird.f32 %v2472
  %vm2678 = vweird.f32 %v2672
  %vm2679 = vmor %vm2677, %vm2678
  %v2680 = vsel %vm2679, %v2672, %v2676
  %v2681 = vand.u32 2147483647, %v2472
  %vm2682 = vcmp.eq.f32.partialorder %v2681, 8.507059e+37
  %v2683 = vand.u32 %v2472, 2147483648
  %v2684 = vor.u32 1.1754944e-38, %v2683
  %v2685 = vsel %vm2682, %v2684, %v2680
  %v2686 = vmul.f32 %v2440, %v2685
  %v2687 = vrcp.pop %v2473
  %v2688 = vmul.f32 %v2473, %v2687
  %v2689 = vsub.f32 1.0, %v2688
  %v2690 = vmul.f32 %v2687, %v2689
  %v2691 = vadd.f32 %v2687, %v2690
  %vm2692 = vweird.f32 %v2473
  %vm2693 = vweird.f32 %v2687
  %vm2694 = vmor %vm2692, %vm2693
  %v2695 = vsel %vm2694, %v2687, %v2691
  %v2696 = vand.u32 2147483647, %v2473
  %vm2697 = vcmp.eq.f32.partialorder %v2696, 8.507059e+37
  %v2698 = vand.u32 %v2473, 2147483648
  %v2699 = vor.u32 1.1754944e-38, %v2698
  %v2700 = vsel %vm2697, %v2699, %v2695
  %v2701 = vmul.f32 %v2441, %v2700
  %v2702 = vrcp.pop %v2474
  %v2703 = vmul.f32 %v2474, %v2702
  %v2704 = vsub.f32 1.0, %v2703
  %v2705 = vmul.f32 %v2702, %v2704
  %v2706 = vadd.f32 %v2702, %v2705
  %vm2707 = vweird.f32 %v2474
  %vm2708 = vweird.f32 %v2702
  %vm2709 = vmor %vm2707, %vm2708
  %v2710 = vsel %vm2709, %v2702, %v2706
  %v2711 = vand.u32 2147483647, %v2474
  %vm2712 = vcmp.eq.f32.partialorder %v2711, 8.507059e+37
  %v2713 = vand.u32 %v2474, 2147483648
  %v2714 = vor.u32 1.1754944e-38, %v2713
  %v2715 = vsel %vm2712, %v2714, %v2710
  %v2716 = vmul.f32 %v2442, %v2715
  %v2717 = vrcp.pop %v2475
  %v2718 = vmul.f32 %v2475, %v2717
  %v2719 = vsub.f32 1.0, %v2718
  %v2720 = vmul.f32 %v2717, %v2719
  %v2721 = vadd.f32 %v2717, %v2720
  %vm2722 = vweird.f32 %v2475
  %vm2723 = vweird.f32 %v2717
  %vm2724 = vmor %vm2722, %vm2723
  %v2725 = vsel %vm2724, %v2717, %v2721
  %v2726 = vand.u32 2147483647, %v2475
  %vm2727 = vcmp.eq.f32.partialorder %v2726, 8.507059e+37
  %v2728 = vand.u32 %v2475, 2147483648
  %v2729 = vor.u32 1.1754944e-38, %v2728
  %v2730 = vsel %vm2727, %v2729, %v2725
  %v2731 = vmul.f32 %v2443, %v2730
  %v2732 = vrcp.pop %v2476
  %v2733 = vmul.f32 %v2476, %v2732
  %v2734 = vsub.f32 1.0, %v2733
  %v2735 = vmul.f32 %v2732, %v2734
  %v2736 = vadd.f32 %v2732, %v2735
  %vm2737 = vweird.f32 %v2476
  %vm2738 = vweird.f32 %v2732
  %vm2739 = vmor %vm2737, %vm2738
  %v2740 = vsel %vm2739, %v2732, %v2736
  %v2741 = vand.u32 2147483647, %v2476
  %vm2742 = vcmp.eq.f32.partialorder %v2741, 8.507059e+37
  %v2743 = vand.u32 %v2476, 2147483648
  %v2744 = vor.u32 1.1754944e-38, %v2743
  %v2745 = vsel %vm2742, %v2744, %v2740
  %v2746 = vmul.f32 %v2444, %v2745
  %v2747 = vrcp.pop %v2477
  %v2748 = vmul.f32 %v2477, %v2747
  %v2749 = vsub.f32 1.0, %v2748
  %v2750 = vmul.f32 %v2747, %v2749
  %v2751 = vadd.f32 %v2747, %v2750
  %vm2752 = vweird.f32 %v2477
  %vm2753 = vweird.f32 %v2747
  %vm2754 = vmor %vm2752, %vm2753
  %v2755 = vsel %vm2754, %v2747, %v2751
  %v2756 = vand.u32 2147483647, %v2477
  %vm2757 = vcmp.eq.f32.partialorder %v2756, 8.507059e+37
  %v2758 = vand.u32 %v2477, 2147483648
  %v2759 = vor.u32 1.1754944e-38, %v2758
  %v2760 = vsel %vm2757, %v2759, %v2755
  %v2761 = vmul.f32 %v2445, %v2760
  %v2762 = vrcp.pop %v2478
  %v2763 = vmul.f32 %v2478, %v2762
  %v2764 = vsub.f32 1.0, %v2763
  %v2765 = vmul.f32 %v2762, %v2764
  %v2766 = vadd.f32 %v2762, %v2765
  %vm2767 = vweird.f32 %v2478
  %vm2768 = vweird.f32 %v2762
  %vm2769 = vmor %vm2767, %vm2768
  %v2770 = vsel %vm2769, %v2762, %v2766
  %v2771 = vand.u32 2147483647, %v2478
  %vm2772 = vcmp.eq.f32.partialorder %v2771, 8.507059e+37
  %v2773 = vand.u32 %v2478, 2147483648
  %v2774 = vor.u32 1.1754944e-38, %v2773
  %v2775 = vsel %vm2772, %v2774, %v2770
  %v2776 = vmul.f32 %v2446, %v2775
  %v2777 = vrcp.pop %v2479
  %v2778 = vmul.f32 %v2479, %v2777
  %v2779 = vsub.f32 1.0, %v2778
  %v2780 = vmul.f32 %v2777, %v2779
  %v2781 = vadd.f32 %v2777, %v2780
  %vm2782 = vweird.f32 %v2479
  %vm2783 = vweird.f32 %v2777
  %vm2784 = vmor %vm2782, %vm2783
  %v2785 = vsel %vm2784, %v2777, %v2781
  %v2786 = vand.u32 2147483647, %v2479
  %vm2787 = vcmp.eq.f32.partialorder %v2786, 8.507059e+37
  %v2788 = vand.u32 %v2479, 2147483648
  %v2789 = vor.u32 1.1754944e-38, %v2788
  %v2790 = vsel %vm2787, %v2789, %v2785
  %v2791 = vmul.f32 %v2447, %v2790
  %v2792 = vrcp.pop %v2480
  %v2793 = vmul.f32 %v2480, %v2792
  %v2794 = vsub.f32 1.0, %v2793
  %v2795 = vmul.f32 %v2792, %v2794
  %v2796 = vadd.f32 %v2792, %v2795
  %vm2797 = vweird.f32 %v2480
  %vm2798 = vweird.f32 %v2792
  %vm2799 = vmor %vm2797, %vm2798
  %v2800 = vsel %vm2799, %v2792, %v2796
  %v2801 = vand.u32 2147483647, %v2480
  %vm2802 = vcmp.eq.f32.partialorder %v2801, 8.507059e+37
  %v2803 = vand.u32 %v2480, 2147483648
  %v2804 = vor.u32 1.1754944e-38, %v2803
  %v2805 = vsel %vm2802, %v2804, %v2800
  %v2806 = vmul.f32 %v2448, %v2805
  %v2807 = vrcp.pop %v2481
  %v2808 = vmul.f32 %v2481, %v2807
  %v2809 = vsub.f32 1.0, %v2808
  %v2810 = vmul.f32 %v2807, %v2809
  %v2811 = vadd.f32 %v2807, %v2810
  %vm2812 = vweird.f32 %v2481
  %vm2813 = vweird.f32 %v2807
  %vm2814 = vmor %vm2812, %vm2813
  %v2815 = vsel %vm2814, %v2807, %v2811
  %v2816 = vand.u32 2147483647, %v2481
  %vm2817 = vcmp.eq.f32.partialorder %v2816, 8.507059e+37
  %v2818 = vand.u32 %v2481, 2147483648
  %v2819 = vor.u32 1.1754944e-38, %v2818
  %v2820 = vsel %vm2817, %v2819, %v2815
  %v2821 = vmul.f32 %v2449, %v2820
  %v2822 = vrcp.pop %v2482
  %v2823 = vmul.f32 %v2482, %v2822
  %v2824 = vsub.f32 1.0, %v2823
  %v2825 = vmul.f32 %v2822, %v2824
  %v2826 = vadd.f32 %v2822, %v2825
  %vm2827 = vweird.f32 %v2482
  %vm2828 = vweird.f32 %v2822
  %vm2829 = vmor %vm2827, %vm2828
  %v2830 = vsel %vm2829, %v2822, %v2826
  %v2831 = vand.u32 2147483647, %v2482
  %vm2832 = vcmp.eq.f32.partialorder %v2831, 8.507059e+37
  %v2833 = vand.u32 %v2482, 2147483648
  %v2834 = vor.u32 1.1754944e-38, %v2833
  %v2835 = vsel %vm2832, %v2834, %v2830
  %v2836 = vmul.f32 %v2450, %v2835
  %v2837 = vrcp.pop %v2483
  %v2838 = vmul.f32 %v2483, %v2837
  %v2839 = vsub.f32 1.0, %v2838
  %v2840 = vmul.f32 %v2837, %v2839
  %v2841 = vadd.f32 %v2837, %v2840
  %vm2842 = vweird.f32 %v2483
  %vm2843 = vweird.f32 %v2837
  %vm2844 = vmor %vm2842, %vm2843
  %v2845 = vsel %vm2844, %v2837, %v2841
  %v2846 = vand.u32 2147483647, %v2483
  %vm2847 = vcmp.eq.f32.partialorder %v2846, 8.507059e+37
  %v2848 = vand.u32 %v2483, 2147483648
  %v2849 = vor.u32 1.1754944e-38, %v2848
  %v2850 = vsel %vm2847, %v2849, %v2845
  %v2851 = vmul.f32 %v2451, %v2850
  %v2852 = vrcp.pop %v2484
  %v2853 = vmul.f32 %v2484, %v2852
  %v2854 = vsub.f32 1.0, %v2853
  %v2855 = vmul.f32 %v2852, %v2854
  %v2856 = vadd.f32 %v2852, %v2855
  %vm2857 = vweird.f32 %v2484
  %vm2858 = vweird.f32 %v2852
  %vm2859 = vmor %vm2857, %vm2858
  %v2860 = vsel %vm2859, %v2852, %v2856
  %v2861 = vand.u32 2147483647, %v2484
  %vm2862 = vcmp.eq.f32.partialorder %v2861, 8.507059e+37
  %v2863 = vand.u32 %v2484, 2147483648
  %v2864 = vor.u32 1.1754944e-38, %v2863
  %v2865 = vsel %vm2862, %v2864, %v2860
  %v2866 = vmul.f32 %v2452, %v2865
  %v2867 = vrcp.pop %v2485
  %v2868 = vmul.f32 %v2485, %v2867
  %v2869 = vsub.f32 1.0, %v2868
  %v2870 = vmul.f32 %v2867, %v2869
  %v2871 = vadd.f32 %v2867, %v2870
  %vm2872 = vweird.f32 %v2485
  %vm2873 = vweird.f32 %v2867
  %vm2874 = vmor %vm2872, %vm2873
  %v2875 = vsel %vm2874, %v2867, %v2871
  %v2876 = vand.u32 2147483647, %v2485
  %vm2877 = vcmp.eq.f32.partialorder %v2876, 8.507059e+37
  %v2878 = vand.u32 %v2485, 2147483648
  %v2879 = vor.u32 1.1754944e-38, %v2878
  %v2880 = vsel %vm2877, %v2879, %v2875
  %v2881 = vmul.f32 %v2453, %v2880
  %v2882 = vrcp.pop %v2486
  %v2883 = vmul.f32 %v2486, %v2882
  %v2884 = vsub.f32 1.0, %v2883
  %v2885 = vmul.f32 %v2882, %v2884
  %v2886 = vadd.f32 %v2882, %v2885
  %vm2887 = vweird.f32 %v2486
  %vm2888 = vweird.f32 %v2882
  %vm2889 = vmor %vm2887, %vm2888
  %v2890 = vsel %vm2889, %v2882, %v2886
  %v2891 = vand.u32 2147483647, %v2486
  %vm2892 = vcmp.eq.f32.partialorder %v2891, 8.507059e+37
  %v2893 = vand.u32 %v2486, 2147483648
  %v2894 = vor.u32 1.1754944e-38, %v2893
  %v2895 = vsel %vm2892, %v2894, %v2890
  %v2896 = vmul.f32 %v2454, %v2895
  %v2897 = vrcp.pop %v2487
  %v2898 = vmul.f32 %v2487, %v2897
  %v2899 = vsub.f32 1.0, %v2898
  %v2900 = vmul.f32 %v2897, %v2899
  %v2901 = vadd.f32 %v2897, %v2900
  %vm2902 = vweird.f32 %v2487
  %vm2903 = vweird.f32 %v2897
  %vm2904 = vmor %vm2902, %vm2903
  %v2905 = vsel %vm2904, %v2897, %v2901
  %v2906 = vand.u32 2147483647, %v2487
  %vm2907 = vcmp.eq.f32.partialorder %v2906, 8.507059e+37
  %v2908 = vand.u32 %v2487, 2147483648
  %v2909 = vor.u32 1.1754944e-38, %v2908
  %v2910 = vsel %vm2907, %v2909, %v2905
  %v2911 = vmul.f32 %v2455, %v2910
  %v2912 = vrcp.pop %v2488
  %v2913 = vmul.f32 %v2488, %v2912
  %v2914 = vsub.f32 1.0, %v2913
  %v2915 = vmul.f32 %v2912, %v2914
  %v2916 = vadd.f32 %v2912, %v2915
  %vm2917 = vweird.f32 %v2488
  %vm2918 = vweird.f32 %v2912
  %vm2919 = vmor %vm2917, %vm2918
  %v2920 = vsel %vm2919, %v2912, %v2916
  %v2921 = vand.u32 2147483647, %v2488
  %vm2922 = vcmp.eq.f32.partialorder %v2921, 8.507059e+37
  %v2923 = vand.u32 %v2488, 2147483648
  %v2924 = vor.u32 1.1754944e-38, %v2923
  %v2925 = vsel %vm2922, %v2924, %v2920
  %v2926 = vmul.f32 %v2456, %v2925
  %v2927 = vrcp.pop %v2489
  %v2928 = vmul.f32 %v2489, %v2927
  %v2929 = vsub.f32 1.0, %v2928
  %v2930 = vmul.f32 %v2927, %v2929
  %v2931 = vadd.f32 %v2927, %v2930
  %vm2932 = vweird.f32 %v2489
  %vm2933 = vweird.f32 %v2927
  %vm2934 = vmor %vm2932, %vm2933
  %v2935 = vsel %vm2934, %v2927, %v2931
  %v2936 = vand.u32 2147483647, %v2489
  %vm2937 = vcmp.eq.f32.partialorder %v2936, 8.507059e+37
  %v2938 = vand.u32 %v2489, 2147483648
  %v2939 = vor.u32 1.1754944e-38, %v2938
  %v2940 = vsel %vm2937, %v2939, %v2935
  %v2941 = vmul.f32 %v2457, %v2940
  %v2942 = vrcp.pop %v2490
  %v2943 = vmul.f32 %v2490, %v2942
  %v2944 = vsub.f32 1.0, %v2943
  %v2945 = vmul.f32 %v2942, %v2944
  %v2946 = vadd.f32 %v2942, %v2945
  %vm2947 = vweird.f32 %v2490
  %vm2948 = vweird.f32 %v2942
  %vm2949 = vmor %vm2947, %vm2948
  %v2950 = vsel %vm2949, %v2942, %v2946
  %v2951 = vand.u32 2147483647, %v2490
  %vm2952 = vcmp.eq.f32.partialorder %v2951, 8.507059e+37
  %v2953 = vand.u32 %v2490, 2147483648
  %v2954 = vor.u32 1.1754944e-38, %v2953
  %v2955 = vsel %vm2952, %v2954, %v2950
  %v2956 = vmul.f32 %v2458, %v2955
  %v2957 = vrcp.pop %v2491
  %v2958 = vmul.f32 %v2491, %v2957
  %v2959 = vsub.f32 1.0, %v2958
  %v2960 = vmul.f32 %v2957, %v2959
  %v2961 = vadd.f32 %v2957, %v2960
  %vm2962 = vweird.f32 %v2491
  %vm2963 = vweird.f32 %v2957
  %vm2964 = vmor %vm2962, %vm2963
  %v2965 = vsel %vm2964, %v2957, %v2961
  %v2966 = vand.u32 2147483647, %v2491
  %vm2967 = vcmp.eq.f32.partialorder %v2966, 8.507059e+37
  %v2968 = vand.u32 %v2491, 2147483648
  %v2969 = vor.u32 1.1754944e-38, %v2968
  %v2970 = vsel %vm2967, %v2969, %v2965
  %v2971 = vmul.f32 %v2459, %v2970
  %vm2972 = vcmask 7168
  %2973 = vst.msk [vmem:[%s6] sm:$0xff] %vm2972, %v2506
  %2974 = vst.msk [vmem:[%s6 + $0x8] sm:$0xff] %vm2972, %v2521
  %2975 = vst.msk [vmem:[%s6 + $0x10] sm:$0xff] %vm2972, %v2536
  %2976 = vst.msk [vmem:[%s6 + $0x18] sm:$0xff] %vm2972, %v2551
  %2977 = vst.msk [vmem:[%s6 + $0x20] sm:$0xff] %vm2972, %v2566
  %2978 = vst.msk [vmem:[%s6 + $0x28] sm:$0xff] %vm2972, %v2581
  %2979 = vst.msk [vmem:[%s6 + $0x30] sm:$0xff] %vm2972, %v2596
  %2980 = vst.msk [vmem:[%s6 + $0x38] sm:$0xff] %vm2972, %v2611
  %2981 = vst.msk [vmem:[%s6 + $0x40] sm:$0xff] %vm2972, %v2626
  %2982 = vst.msk [vmem:[%s6 + $0x48] sm:$0xff] %vm2972, %v2641
  %2983 = vst.msk [vmem:[%s6 + $0x50] sm:$0xff] %vm2972, %v2656
  %2984 = vst.msk [vmem:[%s6 + $0x58] sm:$0xff] %vm2972, %v2671
  %2985 = vst.msk [vmem:[%s6 + $0x60] sm:$0xff] %vm2972, %v2686
  %2986 = vst.msk [vmem:[%s6 + $0x68] sm:$0xff] %vm2972, %v2701
  %2987 = vst.msk [vmem:[%s6 + $0x70] sm:$0xff] %vm2972, %v2716
  %2988 = vst.msk [vmem:[%s6 + $0x78] sm:$0xff] %vm2972, %v2731
  %2989 = vst.msk [vmem:[%s6 + $0x80] sm:$0xff] %vm2972, %v2746
  %2990 = vst.msk [vmem:[%s6 + $0x88] sm:$0xff] %vm2972, %v2761
  %2991 = vst.msk [vmem:[%s6 + $0x90] sm:$0xff] %vm2972, %v2776
  %2992 = vst.msk [vmem:[%s6 + $0x98] sm:$0xff] %vm2972, %v2791
  %2993 = vst.msk [vmem:[%s6 + $0xa0] sm:$0xff] %vm2972, %v2806
  %2994 = vst.msk [vmem:[%s6 + $0xa8] sm:$0xff] %vm2972, %v2821
  %2995 = vst.msk [vmem:[%s6 + $0xb0] sm:$0xff] %vm2972, %v2836
  %2996 = vst.msk [vmem:[%s6 + $0xb8] sm:$0xff] %vm2972, %v2851
  %2997 = vst.msk [vmem:[%s6 + $0xc0] sm:$0xff] %vm2972, %v2866
  %2998 = vst.msk [vmem:[%s6 + $0xc8] sm:$0xff] %vm2972, %v2881
  %2999 = vst.msk [vmem:[%s6 + $0xd0] sm:$0xff] %vm2972, %v2896
  %3000 = vst.msk [vmem:[%s6 + $0xd8] sm:$0xff] %vm2972, %v2911
  %3001 = vst.msk [vmem:[%s6 + $0xe0] sm:$0xff] %vm2972, %v2926
  %3002 = vst.msk [vmem:[%s6 + $0xe8] sm:$0xff] %vm2972, %v2941
  %3003 = vst.msk [vmem:[%s6 + $0xf0] sm:$0xff] %vm2972, %v2956
  %3004 = vst.msk [vmem:[%s6 + $0xf8] sm:$0xff] %vm2972, %v2971
  // Predicated region
  $region26: #{tpu_custom_call.1} parent=0 // pred_check
    _
  $region27: #{tpu_custom_call.1} parent=0 // pred_check_branch
    %3006 = sbr.rel (0) target = $region29
  $region28: #{tpu_custom_call.1} parent=0 // pred_region
    _
  $region29: #{tpu_custom_call.1} parent=0 // pred_fallthru
    _
  // Predicated region
  $region30: #{tpu_custom_call.1} parent=0 // pred_check
    _
  $region31: #{tpu_custom_call.1} parent=0 // pred_check_branch
    %3008 = sbr.rel (0) target = $region33
  $region32: #{tpu_custom_call.1} parent=0 // pred_region
    _
  $region33: #{tpu_custom_call.1} parent=0 // pred_fallthru
    _

</llo_original>
